<compile_context>
chip_gen: v7x
topology: tpu7x:2x2x1
jax: 0.10.0
libtpu: 0.0.40
codegen_flags: <defaults>
</compile_context>

<pallas_src>
import numpy as np
import jax
import jax.numpy as jnp
from jax.experimental import pallas as pl
from jax.experimental.pallas import tpu as pltpu


# ------------------------------- kernel body --------------------------------

def _make_kernel(H, W, NB, activated, has_start):
    L = H * W
    SHIFTS = [dy * W + dx for dy in (-1, 0, 1) for dx in (-1, 0, 1)]

    def dw3x3_relu(x, wm_ref, b):
        # x: (C, L) f32; wm_ref: (9, C, L) taps with boundary masks pre-folded;
        # b: (C, 1) f32.
        acc = b + jnp.zeros_like(x)                     # start from the bias
        for k, s in enumerate(SHIFTS):
            # out[:, i] = x[:, i + s]; wrap-around contributions are removed
            # by the zeroed entries already folded into wm_ref[k].
            shifted = x if s == 0 else pltpu.roll(x, shift=(-s) % L, axis=1)
            acc = acc + wm_ref[k] * shifted
        return jnp.maximum(acc, 0.0)

    def pw(x, w, b, relu):
        # 1x1 conv: x (Cin, L), w (Cout, Cin), b (Cout, 1) -> (Cout, L)
        c_in = x.shape[0]
        if c_in >= 32:
            # Wide channels: use the MXU.
            y = jnp.dot(w, x, preferred_element_type=jnp.float32) + b
        else:
            # Tiny contraction dim: exact f32 VPU broadcast-MACs beat the MXU.
            y = b + jnp.zeros((w.shape[0], x.shape[1]), jnp.float32)
            for c in range(c_in):
                y = y + w[:, c:c + 1] * x[c:c + 1, :]
        return jnp.maximum(y, 0.0) if relu else y

    def kernel(*refs):
        if has_start:
            (x_ref, st_w, st_b,
             dwa_wm, dwa_b, pwa_w, pwa_b,
             dwb_wm, dwb_b, pwb_w, pwb_b, o_ref) = refs
            stw = st_w[...]
            stb = st_b[...]
        else:
            (x_ref,
             dwa_wm, dwa_b, pwa_w, pwa_b,
             dwb_wm, dwb_b, pwb_w, pwb_b, o_ref) = refs

        # Tiny weights: read once per grid step, reused across the NB batch rows.
        da_b = dwa_b[...]
        pa_w = pwa_w[...]
        pa_b = pwa_b[...]
        db_b = dwb_b[...]
        pb_w = pwb_w[...]
        pb_b = pwb_b[...]

        for n in range(NB):                              # static unroll over batch block
            x0 = x_ref[n].astype(jnp.float32)            # (C_in, L)
            x_in = pw(x0, stw, stb, True) if has_start else x0

            # conv_a: depthwise3x3 + ReLU, then 1x1 + ReLU
            h = dw3x3_relu(x_in, dwa_wm, da_b)
            h = pw(h, pa_w, pa_b, True)
            # conv_b: depthwise3x3 + ReLU, then 1x1 (no activation)
            h = dw3x3_relu(h, dwb_wm, db_b)
            h = pw(h, pb_w, pb_b, False)

            y = h + x_in                                 # residual
            if activated:
                y = jnp.maximum(y, 0.0)
            o_ref[n] = y.astype(o_ref.dtype)

    return kernel


# ------------------------------- host helpers --------------------------------

def _dw_tap_weights(w, H, W):
    """Depthwise 3x3 weights (C,3,3) -> (9, C, H*W) f32 with the SAME-padding
    boundary masks folded into every tap (host-side constant folding)."""
    C = w.shape[0]
    L = H * W
    idx = np.arange(L)
    col = idx % W
    masks = np.empty((9, L), np.float32)
    k = 0
    for dy in (-1, 0, 1):
        for dx in (-1, 0, 1):
            s = dy * W + dx
            valid = ((idx + s >= 0) & (idx + s < L) &
                     (col + dx >= 0) & (col + dx < W))
            masks[k] = valid.astype(np.float32)
            k += 1
    w9 = jnp.asarray(w, jnp.float32).reshape(C, 9)            # row-major taps
    return w9.T[:, :, None] * jnp.asarray(masks)[:, None, :]  # (9, C, L)


def _pick_batch_block(N, C_out, L):
    """Largest divisor of N (capped) so the activation block stays small."""
    budget_elems = 1 << 20                      # ~4 MiB of f32 per block
    cap = max(1, min(8, budget_elems // max(1, C_out * L)))
    nb = 1
    for d in range(1, N + 1):
        if N % d == 0 and d <= cap:
            nb = d
    return nb


def cheap_conv_block(x, params, activated):
    """Fused CheapConvBlock forward. x: (N, C_in, H, W) NCHW."""
    N, C_in, H, W = x.shape
    C_out = params["pwa_w"].shape[0]
    has_start = "start_w" in params
    if not has_start:
        assert C_in == C_out, "start conv required when in_channels != out_channels"
    L = H * W
    NB = _pick_batch_block(N, C_out, L)

    x3 = x.reshape(N, C_in, L)  # free contiguous reshape, no transpose

    inputs = [x3]
    in_specs = [pl.BlockSpec((NB, C_in, L), lambda g: (g, 0, 0))]

    def add_const(a):
        a = jnp.asarray(a, jnp.float32)
        inputs.append(a)
        zeros = (0,) * a.ndim
        in_specs.append(pl.BlockSpec(a.shape, lambda g, z=zeros: z))

    if has_start:
        add_const(params["start_w"])                               # (C_out, C_in)
        add_const(jnp.reshape(params["start_b"], (C_out, 1)))
    add_const(_dw_tap_weights(params["dwa_w"], H, W))              # (9, C_out, L)
    add_const(jnp.reshape(params["dwa_b"], (C_out, 1)))
    add_const(params["pwa_w"])                                     # (C_out, C_out)
    add_const(jnp.reshape(params["pwa_b"], (C_out, 1)))
    add_const(_dw_tap_weights(params["dwb_w"], H, W))
    add_const(jnp.reshape(params["dwb_b"], (C_out, 1)))
    add_const(params["pwb_w"])
    add_const(jnp.reshape(params["pwb_b"], (C_out, 1)))

    kernel = _make_kernel(H=H, W=W, NB=NB, activated=activated, has_start=has_start)

    flops = N * L * (2 * (2 * 9 * C_out) + 2 * (2 * C_out * C_out)
                     + (2 * C_in * C_out if has_start else 0))
    bytes_accessed = 4 * (x3.size + N * C_out * L) + \
        4 * sum(int(np.prod(a.shape)) for a in inputs[1:])

    out3 = pl.pallas_call(
        kernel,
        out_shape=jax.ShapeDtypeStruct((N, C_out, L), x.dtype),
        grid=(N // NB,),
        in_specs=in_specs,
        out_specs=pl.BlockSpec((NB, C_out, L), lambda g: (g, 0, 0)),
        compiler_params=pltpu.CompilerParams(dimension_semantics=("parallel",)),
        cost_estimate=pl.CostEstimate(flops=int(flops), transcendentals=0,
                                      bytes_accessed=int(bytes_accessed)),
    )(*inputs)

    return out3.reshape(N, C_out, H, W)


# ----------------------------- pure-JAX reference ---------------------------

def _ref_block(x, p, activated):
    def dw_relu(x, w, b):
        C = x.shape[1]
        y = jax.lax.conv_general_dilated(
            x, w.reshape(C, 1, 3, 3), window_strides=(1, 1),
            padding=((1, 1), (1, 1)), feature_group_count=C,
            dimension_numbers=("NCHW", "OIHW", "NCHW"))
        return jax.nn.relu(y + b.reshape(1, C, 1, 1))

    def pw(x, w, b, relu):
        y = jnp.einsum("oc,nchw->nohw", w, x) + b.reshape(1, -1, 1, 1)
        return jax.nn.relu(y) if relu else y

    x_in = x
    if "start_w" in p:
        x_in = pw(x_in, p["start_w"], p["start_b"], True)
    h = dw_relu(x_in, p["dwa_w"], p["dwa_b"])
    h = pw(h, p["pwa_w"], p["pwa_b"], True)
    h = dw_relu(h, p["dwb_w"], p["dwb_b"])
    h = pw(h, p["pwb_w"], p["pwb_b"], False)
    y = h + x_in
    return jax.nn.relu(y) if activated else y


if __name__ == "__main__":
    key = jax.random.PRNGKey(0)
    N, H, W = 2, 16, 16

    def make_params(key, c_in, c_out):
        ks = jax.random.split(key, 10)
        p = {}
        if c_in != c_out:
            p["start_w"] = 0.3 * jax.random.normal(ks[0], (c_out, c_in), jnp.float32)
            p["start_b"] = 0.1 * jax.random.normal(ks[1], (c_out,), jnp.float32)
        p["dwa_w"] = 0.3 * jax.random.normal(ks[2], (c_out, 3, 3), jnp.float32)
        p["dwa_b"] = 0.1 * jax.random.normal(ks[3], (c_out,), jnp.float32)
        p["pwa_w"] = 0.3 * jax.random.normal(ks[4], (c_out, c_out), jnp.float32)
        p["pwa_b"] = 0.1 * jax.random.normal(ks[5], (c_out,), jnp.float32)
        p["dwb_w"] = 0.3 * jax.random.normal(ks[6], (c_out, 3, 3), jnp.float32)
        p["dwb_b"] = 0.1 * jax.random.normal(ks[7], (c_out,), jnp.float32)
        p["pwb_w"] = 0.3 * jax.random.normal(ks[8], (c_out, c_out), jnp.float32)
        p["pwb_b"] = 0.1 * jax.random.normal(ks[9], (c_out,), jnp.float32)
        return p

    k1, k2, kx1, kx2 = jax.random.split(key, 4)

    # Config 1: in_channels == out_channels == 4 (start=None), activated=True.
    x1 = jax.random.normal(kx1, (N, 4, H, W), jnp.float32)
    p1 = make_params(k1, 4, 4)
    out1 = jax.block_until_ready(cheap_conv_block(x1, p1, activated=True))
    ref1 = _ref_block(x1, p1, activated=True)
    np.testing.assert_allclose(np.asarray(out1), np.asarray(ref1),
                               rtol=1e-4, atol=1e-4)

    # Config 2: in_channels=4 != out_channels=8 (1x1 start conv + ReLU), activated=False.
    x2 = jax.random.normal(kx2, (N, 4, H, W), jnp.float32)
    p2 = make_params(k2, 4, 8)
    out2 = jax.block_until_ready(cheap_conv_block(x2, p2, activated=False))
    ref2 = _ref_block(x2, p2, activated=False)
    np.testing.assert_allclose(np.asarray(out2), np.asarray(ref2),
                               rtol=1e-4, atol=1e-4)

    print("KERNEL_OK")
</pallas_src>

<mosaic_0001>
module attributes {stable_mosaic.version = 11 : i64} {
  func.func @kernel(%arg0: i32, %arg1: memref<2x4x256xf32, #tpu.memory_space<vmem>>, %arg2: memref<9x4x256xf32, #tpu.memory_space<vmem>>, %arg3: memref<4x1xf32, #tpu.memory_space<vmem>>, %arg4: memref<4x4xf32, #tpu.memory_space<vmem>>, %arg5: memref<4x1xf32, #tpu.memory_space<vmem>>, %arg6: memref<9x4x256xf32, #tpu.memory_space<vmem>>, %arg7: memref<4x1xf32, #tpu.memory_space<vmem>>, %arg8: memref<4x4xf32, #tpu.memory_space<vmem>>, %arg9: memref<4x1xf32, #tpu.memory_space<vmem>>, %arg10: memref<2x4x256xf32, #tpu.memory_space<vmem>>) attributes {dimension_semantics = [#tpu.dimension_semantics<parallel>], iteration_bounds = array<i64: 1>, scalar_prefetch = 0 : i64, scratch_operands = 0 : i64, tpu.core_type = #tpu.core_type<tc>, window_params = [{transform_indices = @transform_0, window_bounds = array<i64: 2, 4, 256>}, {pipeline_mode = #tpu.pipeline_mode<synchronous>, transform_indices = @transform_1, window_bounds = array<i64: 9, 4, 256>}, {pipeline_mode = #tpu.pipeline_mode<synchronous>, transform_indices = @transform_2, window_bounds = array<i64: 4, 1>}, {pipeline_mode = #tpu.pipeline_mode<synchronous>, transform_indices = @transform_3, window_bounds = array<i64: 4, 4>}, {pipeline_mode = #tpu.pipeline_mode<synchronous>, transform_indices = @transform_4, window_bounds = array<i64: 4, 1>}, {pipeline_mode = #tpu.pipeline_mode<synchronous>, transform_indices = @transform_5, window_bounds = array<i64: 9, 4, 256>}, {pipeline_mode = #tpu.pipeline_mode<synchronous>, transform_indices = @transform_6, window_bounds = array<i64: 4, 1>}, {pipeline_mode = #tpu.pipeline_mode<synchronous>, transform_indices = @transform_7, window_bounds = array<i64: 4, 4>}, {pipeline_mode = #tpu.pipeline_mode<synchronous>, transform_indices = @transform_8, window_bounds = array<i64: 4, 1>}, {transform_indices = @transform_9, window_bounds = array<i64: 2, 4, 256>}]} {
    %c0 = arith.constant 0 : index
    %c0_0 = arith.constant 0 : index
    %0 = vector.load %arg3[%c0, %c0_0] : memref<4x1xf32, #tpu.memory_space<vmem>>, vector<4x1xf32>
    %c0_1 = arith.constant 0 : index
    %c0_2 = arith.constant 0 : index
    %1 = vector.load %arg4[%c0_1, %c0_2] : memref<4x4xf32, #tpu.memory_space<vmem>>, vector<4x4xf32>
    %c0_3 = arith.constant 0 : index
    %c0_4 = arith.constant 0 : index
    %2 = vector.load %arg5[%c0_3, %c0_4] : memref<4x1xf32, #tpu.memory_space<vmem>>, vector<4x1xf32>
    %c0_5 = arith.constant 0 : index
    %c0_6 = arith.constant 0 : index
    %3 = vector.load %arg7[%c0_5, %c0_6] : memref<4x1xf32, #tpu.memory_space<vmem>>, vector<4x1xf32>
    %c0_7 = arith.constant 0 : index
    %c0_8 = arith.constant 0 : index
    %4 = vector.load %arg8[%c0_7, %c0_8] : memref<4x4xf32, #tpu.memory_space<vmem>>, vector<4x4xf32>
    %c0_9 = arith.constant 0 : index
    %c0_10 = arith.constant 0 : index
    %5 = vector.load %arg9[%c0_9, %c0_10] : memref<4x1xf32, #tpu.memory_space<vmem>>, vector<4x1xf32>
    %c0_11 = arith.constant 0 : index
    %c0_12 = arith.constant 0 : index
    %c0_13 = arith.constant 0 : index
    %6 = vector.load %arg1[%c0_11, %c0_12, %c0_13] : memref<2x4x256xf32, #tpu.memory_space<vmem>>, vector<1x4x256xf32>
    %7 = vector.shape_cast %6 : vector<1x4x256xf32> to vector<4x256xf32>
    %cst = arith.constant 0.000000e+00 : f32
    %8 = vector.broadcast %cst : f32 to vector<4x256xf32>
    %9 = vector.broadcast %0 : vector<4x1xf32> to vector<4x256xf32>
    %10 = arith.addf %9, %8 : vector<4x256xf32>
    %c17_i32 = arith.constant 17 : i32
    %11 = tpu.dynamic_rotate %7 by %c17_i32 dim 1 : vector<4x256xf32>, i32 -> vector<4x256xf32>
    %c0_14 = arith.constant 0 : index
    %c0_15 = arith.constant 0 : index
    %c0_16 = arith.constant 0 : index
    %12 = vector.load %arg2[%c0_14, %c0_15, %c0_16] : memref<9x4x256xf32, #tpu.memory_space<vmem>>, vector<1x4x256xf32>
    %13 = vector.shape_cast %12 : vector<1x4x256xf32> to vector<4x256xf32>
    %14 = arith.mulf %13, %11 : vector<4x256xf32>
    %15 = arith.addf %10, %14 : vector<4x256xf32>
    %c16_i32 = arith.constant 16 : i32
    %16 = tpu.dynamic_rotate %7 by %c16_i32 dim 1 : vector<4x256xf32>, i32 -> vector<4x256xf32>
    %c1 = arith.constant 1 : index
    %c0_17 = arith.constant 0 : index
    %c0_18 = arith.constant 0 : index
    %17 = vector.load %arg2[%c1, %c0_17, %c0_18] : memref<9x4x256xf32, #tpu.memory_space<vmem>>, vector<1x4x256xf32>
    %18 = vector.shape_cast %17 : vector<1x4x256xf32> to vector<4x256xf32>
    %19 = arith.mulf %18, %16 : vector<4x256xf32>
    %20 = arith.addf %15, %19 : vector<4x256xf32>
    %c15_i32 = arith.constant 15 : i32
    %21 = tpu.dynamic_rotate %7 by %c15_i32 dim 1 : vector<4x256xf32>, i32 -> vector<4x256xf32>
    %c2 = arith.constant 2 : index
    %c0_19 = arith.constant 0 : index
    %c0_20 = arith.constant 0 : index
    %22 = vector.load %arg2[%c2, %c0_19, %c0_20] : memref<9x4x256xf32, #tpu.memory_space<vmem>>, vector<1x4x256xf32>
    %23 = vector.shape_cast %22 : vector<1x4x256xf32> to vector<4x256xf32>
    %24 = arith.mulf %23, %21 : vector<4x256xf32>
    %25 = arith.addf %20, %24 : vector<4x256xf32>
    %c1_i32 = arith.constant 1 : i32
    %26 = tpu.dynamic_rotate %7 by %c1_i32 dim 1 : vector<4x256xf32>, i32 -> vector<4x256xf32>
    %c3 = arith.constant 3 : index
    %c0_21 = arith.constant 0 : index
    %c0_22 = arith.constant 0 : index
    %27 = vector.load %arg2[%c3, %c0_21, %c0_22] : memref<9x4x256xf32, #tpu.memory_space<vmem>>, vector<1x4x256xf32>
    %28 = vector.shape_cast %27 : vector<1x4x256xf32> to vector<4x256xf32>
    %29 = arith.mulf %28, %26 : vector<4x256xf32>
    %30 = arith.addf %25, %29 : vector<4x256xf32>
    %c4 = arith.constant 4 : index
    %c0_23 = arith.constant 0 : index
    %c0_24 = arith.constant 0 : index
    %31 = vector.load %arg2[%c4, %c0_23, %c0_24] : memref<9x4x256xf32, #tpu.memory_space<vmem>>, vector<1x4x256xf32>
    %32 = vector.shape_cast %31 : vector<1x4x256xf32> to vector<4x256xf32>
    %33 = arith.mulf %32, %7 : vector<4x256xf32>
    %34 = arith.addf %30, %33 : vector<4x256xf32>
    %c255_i32 = arith.constant 255 : i32
    %35 = tpu.dynamic_rotate %7 by %c255_i32 dim 1 : vector<4x256xf32>, i32 -> vector<4x256xf32>
    %c5 = arith.constant 5 : index
    %c0_25 = arith.constant 0 : index
    %c0_26 = arith.constant 0 : index
    %36 = vector.load %arg2[%c5, %c0_25, %c0_26] : memref<9x4x256xf32, #tpu.memory_space<vmem>>, vector<1x4x256xf32>
    %37 = vector.shape_cast %36 : vector<1x4x256xf32> to vector<4x256xf32>
    %38 = arith.mulf %37, %35 : vector<4x256xf32>
    %39 = arith.addf %34, %38 : vector<4x256xf32>
    %c241_i32 = arith.constant 241 : i32
    %40 = tpu.dynamic_rotate %7 by %c241_i32 dim 1 : vector<4x256xf32>, i32 -> vector<4x256xf32>
    %c6 = arith.constant 6 : index
    %c0_27 = arith.constant 0 : index
    %c0_28 = arith.constant 0 : index
    %41 = vector.load %arg2[%c6, %c0_27, %c0_28] : memref<9x4x256xf32, #tpu.memory_space<vmem>>, vector<1x4x256xf32>
    %42 = vector.shape_cast %41 : vector<1x4x256xf32> to vector<4x256xf32>
    %43 = arith.mulf %42, %40 : vector<4x256xf32>
    %44 = arith.addf %39, %43 : vector<4x256xf32>
    %c240_i32 = arith.constant 240 : i32
    %45 = tpu.dynamic_rotate %7 by %c240_i32 dim 1 : vector<4x256xf32>, i32 -> vector<4x256xf32>
    %c7 = arith.constant 7 : index
    %c0_29 = arith.constant 0 : index
    %c0_30 = arith.constant 0 : index
    %46 = vector.load %arg2[%c7, %c0_29, %c0_30] : memref<9x4x256xf32, #tpu.memory_space<vmem>>, vector<1x4x256xf32>
    %47 = vector.shape_cast %46 : vector<1x4x256xf32> to vector<4x256xf32>
    %48 = arith.mulf %47, %45 : vector<4x256xf32>
    %49 = arith.addf %44, %48 : vector<4x256xf32>
    %c239_i32 = arith.constant 239 : i32
    %50 = tpu.dynamic_rotate %7 by %c239_i32 dim 1 : vector<4x256xf32>, i32 -> vector<4x256xf32>
    %c8 = arith.constant 8 : index
    %c0_31 = arith.constant 0 : index
    %c0_32 = arith.constant 0 : index
    %51 = vector.load %arg2[%c8, %c0_31, %c0_32] : memref<9x4x256xf32, #tpu.memory_space<vmem>>, vector<1x4x256xf32>
    %52 = vector.shape_cast %51 : vector<1x4x256xf32> to vector<4x256xf32>
    %53 = arith.mulf %52, %50 : vector<4x256xf32>
    %54 = arith.addf %49, %53 : vector<4x256xf32>
    %cst_33 = arith.constant 0.000000e+00 : f32
    %55 = vector.broadcast %cst_33 : f32 to vector<4x256xf32>
    %56 = arith.maximumf %54, %55 : vector<4x256xf32>
    %cst_34 = arith.constant 0.000000e+00 : f32
    %57 = vector.broadcast %cst_34 : f32 to vector<4x256xf32>
    %58 = vector.broadcast %2 : vector<4x1xf32> to vector<4x256xf32>
    %59 = arith.addf %58, %57 : vector<4x256xf32>
    %60 = vector.extract_strided_slice %1 {offsets = [0, 0], sizes = [4, 1], strides = [1, 1]} : vector<4x4xf32> to vector<4x1xf32>
    %61 = vector.extract_strided_slice %56 {offsets = [0, 0], sizes = [1, 256], strides = [1, 1]} : vector<4x256xf32> to vector<1x256xf32>
    %62 = vector.broadcast %60 : vector<4x1xf32> to vector<4x256xf32>
    %63 = vector.broadcast %61 : vector<1x256xf32> to vector<4x256xf32>
    %64 = arith.mulf %62, %63 : vector<4x256xf32>
    %65 = arith.addf %59, %64 : vector<4x256xf32>
    %66 = vector.extract_strided_slice %1 {offsets = [0, 1], sizes = [4, 1], strides = [1, 1]} : vector<4x4xf32> to vector<4x1xf32>
    %67 = vector.extract_strided_slice %56 {offsets = [1, 0], sizes = [1, 256], strides = [1, 1]} : vector<4x256xf32> to vector<1x256xf32>
    %68 = vector.broadcast %66 : vector<4x1xf32> to vector<4x256xf32>
    %69 = vector.broadcast %67 : vector<1x256xf32> to vector<4x256xf32>
    %70 = arith.mulf %68, %69 : vector<4x256xf32>
    %71 = arith.addf %65, %70 : vector<4x256xf32>
    %72 = vector.extract_strided_slice %1 {offsets = [0, 2], sizes = [4, 1], strides = [1, 1]} : vector<4x4xf32> to vector<4x1xf32>
    %73 = vector.extract_strided_slice %56 {offsets = [2, 0], sizes = [1, 256], strides = [1, 1]} : vector<4x256xf32> to vector<1x256xf32>
    %74 = vector.broadcast %72 : vector<4x1xf32> to vector<4x256xf32>
    %75 = vector.broadcast %73 : vector<1x256xf32> to vector<4x256xf32>
    %76 = arith.mulf %74, %75 : vector<4x256xf32>
    %77 = arith.addf %71, %76 : vector<4x256xf32>
    %78 = vector.extract_strided_slice %1 {offsets = [0, 3], sizes = [4, 1], strides = [1, 1]} : vector<4x4xf32> to vector<4x1xf32>
    %79 = vector.extract_strided_slice %56 {offsets = [3, 0], sizes = [1, 256], strides = [1, 1]} : vector<4x256xf32> to vector<1x256xf32>
    %80 = vector.broadcast %78 : vector<4x1xf32> to vector<4x256xf32>
    %81 = vector.broadcast %79 : vector<1x256xf32> to vector<4x256xf32>
    %82 = arith.mulf %80, %81 : vector<4x256xf32>
    %83 = arith.addf %77, %82 : vector<4x256xf32>
    %cst_35 = arith.constant 0.000000e+00 : f32
    %84 = vector.broadcast %cst_35 : f32 to vector<4x256xf32>
    %85 = arith.maximumf %83, %84 : vector<4x256xf32>
    %cst_36 = arith.constant 0.000000e+00 : f32
    %86 = vector.broadcast %cst_36 : f32 to vector<4x256xf32>
    %87 = vector.broadcast %3 : vector<4x1xf32> to vector<4x256xf32>
    %88 = arith.addf %87, %86 : vector<4x256xf32>
    %c17_i32_37 = arith.constant 17 : i32
    %89 = tpu.dynamic_rotate %85 by %c17_i32_37 dim 1 : vector<4x256xf32>, i32 -> vector<4x256xf32>
    %c0_38 = arith.constant 0 : index
    %c0_39 = arith.constant 0 : index
    %c0_40 = arith.constant 0 : index
    %90 = vector.load %arg6[%c0_38, %c0_39, %c0_40] : memref<9x4x256xf32, #tpu.memory_space<vmem>>, vector<1x4x256xf32>
    %91 = vector.shape_cast %90 : vector<1x4x256xf32> to vector<4x256xf32>
    %92 = arith.mulf %91, %89 : vector<4x256xf32>
    %93 = arith.addf %88, %92 : vector<4x256xf32>
    %c16_i32_41 = arith.constant 16 : i32
    %94 = tpu.dynamic_rotate %85 by %c16_i32_41 dim 1 : vector<4x256xf32>, i32 -> vector<4x256xf32>
    %c1_42 = arith.constant 1 : index
    %c0_43 = arith.constant 0 : index
    %c0_44 = arith.constant 0 : index
    %95 = vector.load %arg6[%c1_42, %c0_43, %c0_44] : memref<9x4x256xf32, #tpu.memory_space<vmem>>, vector<1x4x256xf32>
    %96 = vector.shape_cast %95 : vector<1x4x256xf32> to vector<4x256xf32>
    %97 = arith.mulf %96, %94 : vector<4x256xf32>
    %98 = arith.addf %93, %97 : vector<4x256xf32>
    %c15_i32_45 = arith.constant 15 : i32
    %99 = tpu.dynamic_rotate %85 by %c15_i32_45 dim 1 : vector<4x256xf32>, i32 -> vector<4x256xf32>
    %c2_46 = arith.constant 2 : index
    %c0_47 = arith.constant 0 : index
    %c0_48 = arith.constant 0 : index
    %100 = vector.load %arg6[%c2_46, %c0_47, %c0_48] : memref<9x4x256xf32, #tpu.memory_space<vmem>>, vector<1x4x256xf32>
    %101 = vector.shape_cast %100 : vector<1x4x256xf32> to vector<4x256xf32>
    %102 = arith.mulf %101, %99 : vector<4x256xf32>
    %103 = arith.addf %98, %102 : vector<4x256xf32>
    %c1_i32_49 = arith.constant 1 : i32
    %104 = tpu.dynamic_rotate %85 by %c1_i32_49 dim 1 : vector<4x256xf32>, i32 -> vector<4x256xf32>
    %c3_50 = arith.constant 3 : index
    %c0_51 = arith.constant 0 : index
    %c0_52 = arith.constant 0 : index
    %105 = vector.load %arg6[%c3_50, %c0_51, %c0_52] : memref<9x4x256xf32, #tpu.memory_space<vmem>>, vector<1x4x256xf32>
    %106 = vector.shape_cast %105 : vector<1x4x256xf32> to vector<4x256xf32>
    %107 = arith.mulf %106, %104 : vector<4x256xf32>
    %108 = arith.addf %103, %107 : vector<4x256xf32>
    %c4_53 = arith.constant 4 : index
    %c0_54 = arith.constant 0 : index
    %c0_55 = arith.constant 0 : index
    %109 = vector.load %arg6[%c4_53, %c0_54, %c0_55] : memref<9x4x256xf32, #tpu.memory_space<vmem>>, vector<1x4x256xf32>
    %110 = vector.shape_cast %109 : vector<1x4x256xf32> to vector<4x256xf32>
    %111 = arith.mulf %110, %85 : vector<4x256xf32>
    %112 = arith.addf %108, %111 : vector<4x256xf32>
    %c255_i32_56 = arith.constant 255 : i32
    %113 = tpu.dynamic_rotate %85 by %c255_i32_56 dim 1 : vector<4x256xf32>, i32 -> vector<4x256xf32>
    %c5_57 = arith.constant 5 : index
    %c0_58 = arith.constant 0 : index
    %c0_59 = arith.constant 0 : index
    %114 = vector.load %arg6[%c5_57, %c0_58, %c0_59] : memref<9x4x256xf32, #tpu.memory_space<vmem>>, vector<1x4x256xf32>
    %115 = vector.shape_cast %114 : vector<1x4x256xf32> to vector<4x256xf32>
    %116 = arith.mulf %115, %113 : vector<4x256xf32>
    %117 = arith.addf %112, %116 : vector<4x256xf32>
    %c241_i32_60 = arith.constant 241 : i32
    %118 = tpu.dynamic_rotate %85 by %c241_i32_60 dim 1 : vector<4x256xf32>, i32 -> vector<4x256xf32>
    %c6_61 = arith.constant 6 : index
    %c0_62 = arith.constant 0 : index
    %c0_63 = arith.constant 0 : index
    %119 = vector.load %arg6[%c6_61, %c0_62, %c0_63] : memref<9x4x256xf32, #tpu.memory_space<vmem>>, vector<1x4x256xf32>
    %120 = vector.shape_cast %119 : vector<1x4x256xf32> to vector<4x256xf32>
    %121 = arith.mulf %120, %118 : vector<4x256xf32>
    %122 = arith.addf %117, %121 : vector<4x256xf32>
    %c240_i32_64 = arith.constant 240 : i32
    %123 = tpu.dynamic_rotate %85 by %c240_i32_64 dim 1 : vector<4x256xf32>, i32 -> vector<4x256xf32>
    %c7_65 = arith.constant 7 : index
    %c0_66 = arith.constant 0 : index
    %c0_67 = arith.constant 0 : index
    %124 = vector.load %arg6[%c7_65, %c0_66, %c0_67] : memref<9x4x256xf32, #tpu.memory_space<vmem>>, vector<1x4x256xf32>
    %125 = vector.shape_cast %124 : vector<1x4x256xf32> to vector<4x256xf32>
    %126 = arith.mulf %125, %123 : vector<4x256xf32>
    %127 = arith.addf %122, %126 : vector<4x256xf32>
    %c239_i32_68 = arith.constant 239 : i32
    %128 = tpu.dynamic_rotate %85 by %c239_i32_68 dim 1 : vector<4x256xf32>, i32 -> vector<4x256xf32>
    %c8_69 = arith.constant 8 : index
    %c0_70 = arith.constant 0 : index
    %c0_71 = arith.constant 0 : index
    %129 = vector.load %arg6[%c8_69, %c0_70, %c0_71] : memref<9x4x256xf32, #tpu.memory_space<vmem>>, vector<1x4x256xf32>
    %130 = vector.shape_cast %129 : vector<1x4x256xf32> to vector<4x256xf32>
    %131 = arith.mulf %130, %128 : vector<4x256xf32>
    %132 = arith.addf %127, %131 : vector<4x256xf32>
    %cst_72 = arith.constant 0.000000e+00 : f32
    %133 = vector.broadcast %cst_72 : f32 to vector<4x256xf32>
    %134 = arith.maximumf %132, %133 : vector<4x256xf32>
    %cst_73 = arith.constant 0.000000e+00 : f32
    %135 = vector.broadcast %cst_73 : f32 to vector<4x256xf32>
    %136 = vector.broadcast %5 : vector<4x1xf32> to vector<4x256xf32>
    %137 = arith.addf %136, %135 : vector<4x256xf32>
    %138 = vector.extract_strided_slice %4 {offsets = [0, 0], sizes = [4, 1], strides = [1, 1]} : vector<4x4xf32> to vector<4x1xf32>
    %139 = vector.extract_strided_slice %134 {offsets = [0, 0], sizes = [1, 256], strides = [1, 1]} : vector<4x256xf32> to vector<1x256xf32>
    %140 = vector.broadcast %138 : vector<4x1xf32> to vector<4x256xf32>
    %141 = vector.broadcast %139 : vector<1x256xf32> to vector<4x256xf32>
    %142 = arith.mulf %140, %141 : vector<4x256xf32>
    %143 = arith.addf %137, %142 : vector<4x256xf32>
    %144 = vector.extract_strided_slice %4 {offsets = [0, 1], sizes = [4, 1], strides = [1, 1]} : vector<4x4xf32> to vector<4x1xf32>
    %145 = vector.extract_strided_slice %134 {offsets = [1, 0], sizes = [1, 256], strides = [1, 1]} : vector<4x256xf32> to vector<1x256xf32>
    %146 = vector.broadcast %144 : vector<4x1xf32> to vector<4x256xf32>
    %147 = vector.broadcast %145 : vector<1x256xf32> to vector<4x256xf32>
    %148 = arith.mulf %146, %147 : vector<4x256xf32>
    %149 = arith.addf %143, %148 : vector<4x256xf32>
    %150 = vector.extract_strided_slice %4 {offsets = [0, 2], sizes = [4, 1], strides = [1, 1]} : vector<4x4xf32> to vector<4x1xf32>
    %151 = vector.extract_strided_slice %134 {offsets = [2, 0], sizes = [1, 256], strides = [1, 1]} : vector<4x256xf32> to vector<1x256xf32>
    %152 = vector.broadcast %150 : vector<4x1xf32> to vector<4x256xf32>
    %153 = vector.broadcast %151 : vector<1x256xf32> to vector<4x256xf32>
    %154 = arith.mulf %152, %153 : vector<4x256xf32>
    %155 = arith.addf %149, %154 : vector<4x256xf32>
    %156 = vector.extract_strided_slice %4 {offsets = [0, 3], sizes = [4, 1], strides = [1, 1]} : vector<4x4xf32> to vector<4x1xf32>
    %157 = vector.extract_strided_slice %134 {offsets = [3, 0], sizes = [1, 256], strides = [1, 1]} : vector<4x256xf32> to vector<1x256xf32>
    %158 = vector.broadcast %156 : vector<4x1xf32> to vector<4x256xf32>
    %159 = vector.broadcast %157 : vector<1x256xf32> to vector<4x256xf32>
    %160 = arith.mulf %158, %159 : vector<4x256xf32>
    %161 = arith.addf %155, %160 : vector<4x256xf32>
    %162 = arith.addf %161, %7 : vector<4x256xf32>
    %cst_74 = arith.constant 0.000000e+00 : f32
    %163 = vector.broadcast %cst_74 : f32 to vector<4x256xf32>
    %164 = arith.maximumf %162, %163 : vector<4x256xf32>
    %c0_75 = arith.constant 0 : index
    %c0_76 = arith.constant 0 : index
    %c0_77 = arith.constant 0 : index
    %165 = vector.load %arg10[%c0_75, %c0_76, %c0_77] : memref<2x4x256xf32, #tpu.memory_space<vmem>>, vector<1x4x256xf32>
    %166 = vector.shape_cast %165 : vector<1x4x256xf32> to vector<4x256xf32>
    %167 = vector.shape_cast %164 : vector<4x256xf32> to vector<1x4x256xf32>
    tpu.vector_store %arg10[%c0_75, %c0_76, %c0_77], %167 {strides = array<i32>} : memref<2x4x256xf32, #tpu.memory_space<vmem>>, vector<1x4x256xf32>,
    %c1_78 = arith.constant 1 : index
    %c0_79 = arith.constant 0 : index
    %c0_80 = arith.constant 0 : index
    %168 = vector.load %arg1[%c1_78, %c0_79, %c0_80] : memref<2x4x256xf32, #tpu.memory_space<vmem>>, vector<1x4x256xf32>
    %169 = vector.shape_cast %168 : vector<1x4x256xf32> to vector<4x256xf32>
    %cst_81 = arith.constant 0.000000e+00 : f32
    %170 = vector.broadcast %cst_81 : f32 to vector<4x256xf32>
    %171 = vector.broadcast %0 : vector<4x1xf32> to vector<4x256xf32>
    %172 = arith.addf %171, %170 : vector<4x256xf32>
    %c17_i32_82 = arith.constant 17 : i32
    %173 = tpu.dynamic_rotate %169 by %c17_i32_82 dim 1 : vector<4x256xf32>, i32 -> vector<4x256xf32>
    %c0_83 = arith.constant 0 : index
    %c0_84 = arith.constant 0 : index
    %c0_85 = arith.constant 0 : index
    %174 = vector.load %arg2[%c0_83, %c0_84, %c0_85] : memref<9x4x256xf32, #tpu.memory_space<vmem>>, vector<1x4x256xf32>
    %175 = vector.shape_cast %174 : vector<1x4x256xf32> to vector<4x256xf32>
    %176 = arith.mulf %175, %173 : vector<4x256xf32>
    %177 = arith.addf %172, %176 : vector<4x256xf32>
    %c16_i32_86 = arith.constant 16 : i32
    %178 = tpu.dynamic_rotate %169 by %c16_i32_86 dim 1 : vector<4x256xf32>, i32 -> vector<4x256xf32>
    %c1_87 = arith.constant 1 : index
    %c0_88 = arith.constant 0 : index
    %c0_89 = arith.constant 0 : index
    %179 = vector.load %arg2[%c1_87, %c0_88, %c0_89] : memref<9x4x256xf32, #tpu.memory_space<vmem>>, vector<1x4x256xf32>
    %180 = vector.shape_cast %179 : vector<1x4x256xf32> to vector<4x256xf32>
    %181 = arith.mulf %180, %178 : vector<4x256xf32>
    %182 = arith.addf %177, %181 : vector<4x256xf32>
    %c15_i32_90 = arith.constant 15 : i32
    %183 = tpu.dynamic_rotate %169 by %c15_i32_90 dim 1 : vector<4x256xf32>, i32 -> vector<4x256xf32>
    %c2_91 = arith.constant 2 : index
    %c0_92 = arith.constant 0 : index
    %c0_93 = arith.constant 0 : index
    %184 = vector.load %arg2[%c2_91, %c0_92, %c0_93] : memref<9x4x256xf32, #tpu.memory_space<vmem>>, vector<1x4x256xf32>
    %185 = vector.shape_cast %184 : vector<1x4x256xf32> to vector<4x256xf32>
    %186 = arith.mulf %185, %183 : vector<4x256xf32>
    %187 = arith.addf %182, %186 : vector<4x256xf32>
    %c1_i32_94 = arith.constant 1 : i32
    %188 = tpu.dynamic_rotate %169 by %c1_i32_94 dim 1 : vector<4x256xf32>, i32 -> vector<4x256xf32>
    %c3_95 = arith.constant 3 : index
    %c0_96 = arith.constant 0 : index
    %c0_97 = arith.constant 0 : index
    %189 = vector.load %arg2[%c3_95, %c0_96, %c0_97] : memref<9x4x256xf32, #tpu.memory_space<vmem>>, vector<1x4x256xf32>
    %190 = vector.shape_cast %189 : vector<1x4x256xf32> to vector<4x256xf32>
    %191 = arith.mulf %190, %188 : vector<4x256xf32>
    %192 = arith.addf %187, %191 : vector<4x256xf32>
    %c4_98 = arith.constant 4 : index
    %c0_99 = arith.constant 0 : index
    %c0_100 = arith.constant 0 : index
    %193 = vector.load %arg2[%c4_98, %c0_99, %c0_100] : memref<9x4x256xf32, #tpu.memory_space<vmem>>, vector<1x4x256xf32>
    %194 = vector.shape_cast %193 : vector<1x4x256xf32> to vector<4x256xf32>
    %195 = arith.mulf %194, %169 : vector<4x256xf32>
    %196 = arith.addf %192, %195 : vector<4x256xf32>
    %c255_i32_101 = arith.constant 255 : i32
    %197 = tpu.dynamic_rotate %169 by %c255_i32_101 dim 1 : vector<4x256xf32>, i32 -> vector<4x256xf32>
    %c5_102 = arith.constant 5 : index
    %c0_103 = arith.constant 0 : index
    %c0_104 = arith.constant 0 : index
    %198 = vector.load %arg2[%c5_102, %c0_103, %c0_104] : memref<9x4x256xf32, #tpu.memory_space<vmem>>, vector<1x4x256xf32>
    %199 = vector.shape_cast %198 : vector<1x4x256xf32> to vector<4x256xf32>
    %200 = arith.mulf %199, %197 : vector<4x256xf32>
    %201 = arith.addf %196, %200 : vector<4x256xf32>
    %c241_i32_105 = arith.constant 241 : i32
    %202 = tpu.dynamic_rotate %169 by %c241_i32_105 dim 1 : vector<4x256xf32>, i32 -> vector<4x256xf32>
    %c6_106 = arith.constant 6 : index
    %c0_107 = arith.constant 0 : index
    %c0_108 = arith.constant 0 : index
    %203 = vector.load %arg2[%c6_106, %c0_107, %c0_108] : memref<9x4x256xf32, #tpu.memory_space<vmem>>, vector<1x4x256xf32>
    %204 = vector.shape_cast %203 : vector<1x4x256xf32> to vector<4x256xf32>
    %205 = arith.mulf %204, %202 : vector<4x256xf32>
    %206 = arith.addf %201, %205 : vector<4x256xf32>
    %c240_i32_109 = arith.constant 240 : i32
    %207 = tpu.dynamic_rotate %169 by %c240_i32_109 dim 1 : vector<4x256xf32>, i32 -> vector<4x256xf32>
    %c7_110 = arith.constant 7 : index
    %c0_111 = arith.constant 0 : index
    %c0_112 = arith.constant 0 : index
    %208 = vector.load %arg2[%c7_110, %c0_111, %c0_112] : memref<9x4x256xf32, #tpu.memory_space<vmem>>, vector<1x4x256xf32>
    %209 = vector.shape_cast %208 : vector<1x4x256xf32> to vector<4x256xf32>
    %210 = arith.mulf %209, %207 : vector<4x256xf32>
    %211 = arith.addf %206, %210 : vector<4x256xf32>
    %c239_i32_113 = arith.constant 239 : i32
    %212 = tpu.dynamic_rotate %169 by %c239_i32_113 dim 1 : vector<4x256xf32>, i32 -> vector<4x256xf32>
    %c8_114 = arith.constant 8 : index
    %c0_115 = arith.constant 0 : index
    %c0_116 = arith.constant 0 : index
    %213 = vector.load %arg2[%c8_114, %c0_115, %c0_116] : memref<9x4x256xf32, #tpu.memory_space<vmem>>, vector<1x4x256xf32>
    %214 = vector.shape_cast %213 : vector<1x4x256xf32> to vector<4x256xf32>
    %215 = arith.mulf %214, %212 : vector<4x256xf32>
    %216 = arith.addf %211, %215 : vector<4x256xf32>
    %cst_117 = arith.constant 0.000000e+00 : f32
    %217 = vector.broadcast %cst_117 : f32 to vector<4x256xf32>
    %218 = arith.maximumf %216, %217 : vector<4x256xf32>
    %cst_118 = arith.constant 0.000000e+00 : f32
    %219 = vector.broadcast %cst_118 : f32 to vector<4x256xf32>
    %220 = vector.broadcast %2 : vector<4x1xf32> to vector<4x256xf32>
    %221 = arith.addf %220, %219 : vector<4x256xf32>
    %222 = vector.extract_strided_slice %1 {offsets = [0, 0], sizes = [4, 1], strides = [1, 1]} : vector<4x4xf32> to vector<4x1xf32>
    %223 = vector.extract_strided_slice %218 {offsets = [0, 0], sizes = [1, 256], strides = [1, 1]} : vector<4x256xf32> to vector<1x256xf32>
    %224 = vector.broadcast %222 : vector<4x1xf32> to vector<4x256xf32>
    %225 = vector.broadcast %223 : vector<1x256xf32> to vector<4x256xf32>
    %226 = arith.mulf %224, %225 : vector<4x256xf32>
    %227 = arith.addf %221, %226 : vector<4x256xf32>
    %228 = vector.extract_strided_slice %1 {offsets = [0, 1], sizes = [4, 1], strides = [1, 1]} : vector<4x4xf32> to vector<4x1xf32>
    %229 = vector.extract_strided_slice %218 {offsets = [1, 0], sizes = [1, 256], strides = [1, 1]} : vector<4x256xf32> to vector<1x256xf32>
    %230 = vector.broadcast %228 : vector<4x1xf32> to vector<4x256xf32>
    %231 = vector.broadcast %229 : vector<1x256xf32> to vector<4x256xf32>
    %232 = arith.mulf %230, %231 : vector<4x256xf32>
    %233 = arith.addf %227, %232 : vector<4x256xf32>
    %234 = vector.extract_strided_slice %1 {offsets = [0, 2], sizes = [4, 1], strides = [1, 1]} : vector<4x4xf32> to vector<4x1xf32>
    %235 = vector.extract_strided_slice %218 {offsets = [2, 0], sizes = [1, 256], strides = [1, 1]} : vector<4x256xf32> to vector<1x256xf32>
    %236 = vector.broadcast %234 : vector<4x1xf32> to vector<4x256xf32>
    %237 = vector.broadcast %235 : vector<1x256xf32> to vector<4x256xf32>
    %238 = arith.mulf %236, %237 : vector<4x256xf32>
    %239 = arith.addf %233, %238 : vector<4x256xf32>
    %240 = vector.extract_strided_slice %1 {offsets = [0, 3], sizes = [4, 1], strides = [1, 1]} : vector<4x4xf32> to vector<4x1xf32>
    %241 = vector.extract_strided_slice %218 {offsets = [3, 0], sizes = [1, 256], strides = [1, 1]} : vector<4x256xf32> to vector<1x256xf32>
    %242 = vector.broadcast %240 : vector<4x1xf32> to vector<4x256xf32>
    %243 = vector.broadcast %241 : vector<1x256xf32> to vector<4x256xf32>
    %244 = arith.mulf %242, %243 : vector<4x256xf32>
    %245 = arith.addf %239, %244 : vector<4x256xf32>
    %cst_119 = arith.constant 0.000000e+00 : f32
    %246 = vector.broadcast %cst_119 : f32 to vector<4x256xf32>
    %247 = arith.maximumf %245, %246 : vector<4x256xf32>
    %cst_120 = arith.constant 0.000000e+00 : f32
    %248 = vector.broadcast %cst_120 : f32 to vector<4x256xf32>
    %249 = vector.broadcast %3 : vector<4x1xf32> to vector<4x256xf32>
    %250 = arith.addf %249, %248 : vector<4x256xf32>
    %c17_i32_121 = arith.constant 17 : i32
    %251 = tpu.dynamic_rotate %247 by %c17_i32_121 dim 1 : vector<4x256xf32>, i32 -> vector<4x256xf32>
    %c0_122 = arith.constant 0 : index
    %c0_123 = arith.constant 0 : index
    %c0_124 = arith.constant 0 : index
    %252 = vector.load %arg6[%c0_122, %c0_123, %c0_124] : memref<9x4x256xf32, #tpu.memory_space<vmem>>, vector<1x4x256xf32>
    %253 = vector.shape_cast %252 : vector<1x4x256xf32> to vector<4x256xf32>
    %254 = arith.mulf %253, %251 : vector<4x256xf32>
    %255 = arith.addf %250, %254 : vector<4x256xf32>
    %c16_i32_125 = arith.constant 16 : i32
    %256 = tpu.dynamic_rotate %247 by %c16_i32_125 dim 1 : vector<4x256xf32>, i32 -> vector<4x256xf32>
    %c1_126 = arith.constant 1 : index
    %c0_127 = arith.constant 0 : index
    %c0_128 = arith.constant 0 : index
    %257 = vector.load %arg6[%c1_126, %c0_127, %c0_128] : memref<9x4x256xf32, #tpu.memory_space<vmem>>, vector<1x4x256xf32>
    %258 = vector.shape_cast %257 : vector<1x4x256xf32> to vector<4x256xf32>
    %259 = arith.mulf %258, %256 : vector<4x256xf32>
    %260 = arith.addf %255, %259 : vector<4x256xf32>
    %c15_i32_129 = arith.constant 15 : i32
    %261 = tpu.dynamic_rotate %247 by %c15_i32_129 dim 1 : vector<4x256xf32>, i32 -> vector<4x256xf32>
    %c2_130 = arith.constant 2 : index
    %c0_131 = arith.constant 0 : index
    %c0_132 = arith.constant 0 : index
    %262 = vector.load %arg6[%c2_130, %c0_131, %c0_132] : memref<9x4x256xf32, #tpu.memory_space<vmem>>, vector<1x4x256xf32>
    %263 = vector.shape_cast %262 : vector<1x4x256xf32> to vector<4x256xf32>
    %264 = arith.mulf %263, %261 : vector<4x256xf32>
    %265 = arith.addf %260, %264 : vector<4x256xf32>
    %c1_i32_133 = arith.constant 1 : i32
    %266 = tpu.dynamic_rotate %247 by %c1_i32_133 dim 1 : vector<4x256xf32>, i32 -> vector<4x256xf32>
    %c3_134 = arith.constant 3 : index
    %c0_135 = arith.constant 0 : index
    %c0_136 = arith.constant 0 : index
    %267 = vector.load %arg6[%c3_134, %c0_135, %c0_136] : memref<9x4x256xf32, #tpu.memory_space<vmem>>, vector<1x4x256xf32>
    %268 = vector.shape_cast %267 : vector<1x4x256xf32> to vector<4x256xf32>
    %269 = arith.mulf %268, %266 : vector<4x256xf32>
    %270 = arith.addf %265, %269 : vector<4x256xf32>
    %c4_137 = arith.constant 4 : index
    %c0_138 = arith.constant 0 : index
    %c0_139 = arith.constant 0 : index
    %271 = vector.load %arg6[%c4_137, %c0_138, %c0_139] : memref<9x4x256xf32, #tpu.memory_space<vmem>>, vector<1x4x256xf32>
    %272 = vector.shape_cast %271 : vector<1x4x256xf32> to vector<4x256xf32>
    %273 = arith.mulf %272, %247 : vector<4x256xf32>
    %274 = arith.addf %270, %273 : vector<4x256xf32>
    %c255_i32_140 = arith.constant 255 : i32
    %275 = tpu.dynamic_rotate %247 by %c255_i32_140 dim 1 : vector<4x256xf32>, i32 -> vector<4x256xf32>
    %c5_141 = arith.constant 5 : index
    %c0_142 = arith.constant 0 : index
    %c0_143 = arith.constant 0 : index
    %276 = vector.load %arg6[%c5_141, %c0_142, %c0_143] : memref<9x4x256xf32, #tpu.memory_space<vmem>>, vector<1x4x256xf32>
    %277 = vector.shape_cast %276 : vector<1x4x256xf32> to vector<4x256xf32>
    %278 = arith.mulf %277, %275 : vector<4x256xf32>
    %279 = arith.addf %274, %278 : vector<4x256xf32>
    %c241_i32_144 = arith.constant 241 : i32
    %280 = tpu.dynamic_rotate %247 by %c241_i32_144 dim 1 : vector<4x256xf32>, i32 -> vector<4x256xf32>
    %c6_145 = arith.constant 6 : index
    %c0_146 = arith.constant 0 : index
    %c0_147 = arith.constant 0 : index
    %281 = vector.load %arg6[%c6_145, %c0_146, %c0_147] : memref<9x4x256xf32, #tpu.memory_space<vmem>>, vector<1x4x256xf32>
    %282 = vector.shape_cast %281 : vector<1x4x256xf32> to vector<4x256xf32>
    %283 = arith.mulf %282, %280 : vector<4x256xf32>
    %284 = arith.addf %279, %283 : vector<4x256xf32>
    %c240_i32_148 = arith.constant 240 : i32
    %285 = tpu.dynamic_rotate %247 by %c240_i32_148 dim 1 : vector<4x256xf32>, i32 -> vector<4x256xf32>
    %c7_149 = arith.constant 7 : index
    %c0_150 = arith.constant 0 : index
    %c0_151 = arith.constant 0 : index
    %286 = vector.load %arg6[%c7_149, %c0_150, %c0_151] : memref<9x4x256xf32, #tpu.memory_space<vmem>>, vector<1x4x256xf32>
    %287 = vector.shape_cast %286 : vector<1x4x256xf32> to vector<4x256xf32>
    %288 = arith.mulf %287, %285 : vector<4x256xf32>
    %289 = arith.addf %284, %288 : vector<4x256xf32>
    %c239_i32_152 = arith.constant 239 : i32
    %290 = tpu.dynamic_rotate %247 by %c239_i32_152 dim 1 : vector<4x256xf32>, i32 -> vector<4x256xf32>
    %c8_153 = arith.constant 8 : index
    %c0_154 = arith.constant 0 : index
    %c0_155 = arith.constant 0 : index
    %291 = vector.load %arg6[%c8_153, %c0_154, %c0_155] : memref<9x4x256xf32, #tpu.memory_space<vmem>>, vector<1x4x256xf32>
    %292 = vector.shape_cast %291 : vector<1x4x256xf32> to vector<4x256xf32>
    %293 = arith.mulf %292, %290 : vector<4x256xf32>
    %294 = arith.addf %289, %293 : vector<4x256xf32>
    %cst_156 = arith.constant 0.000000e+00 : f32
    %295 = vector.broadcast %cst_156 : f32 to vector<4x256xf32>
    %296 = arith.maximumf %294, %295 : vector<4x256xf32>
    %cst_157 = arith.constant 0.000000e+00 : f32
    %297 = vector.broadcast %cst_157 : f32 to vector<4x256xf32>
    %298 = vector.broadcast %5 : vector<4x1xf32> to vector<4x256xf32>
    %299 = arith.addf %298, %297 : vector<4x256xf32>
    %300 = vector.extract_strided_slice %4 {offsets = [0, 0], sizes = [4, 1], strides = [1, 1]} : vector<4x4xf32> to vector<4x1xf32>
    %301 = vector.extract_strided_slice %296 {offsets = [0, 0], sizes = [1, 256], strides = [1, 1]} : vector<4x256xf32> to vector<1x256xf32>
    %302 = vector.broadcast %300 : vector<4x1xf32> to vector<4x256xf32>
    %303 = vector.broadcast %301 : vector<1x256xf32> to vector<4x256xf32>
    %304 = arith.mulf %302, %303 : vector<4x256xf32>
    %305 = arith.addf %299, %304 : vector<4x256xf32>
    %306 = vector.extract_strided_slice %4 {offsets = [0, 1], sizes = [4, 1], strides = [1, 1]} : vector<4x4xf32> to vector<4x1xf32>
    %307 = vector.extract_strided_slice %296 {offsets = [1, 0], sizes = [1, 256], strides = [1, 1]} : vector<4x256xf32> to vector<1x256xf32>
    %308 = vector.broadcast %306 : vector<4x1xf32> to vector<4x256xf32>
    %309 = vector.broadcast %307 : vector<1x256xf32> to vector<4x256xf32>
    %310 = arith.mulf %308, %309 : vector<4x256xf32>
    %311 = arith.addf %305, %310 : vector<4x256xf32>
    %312 = vector.extract_strided_slice %4 {offsets = [0, 2], sizes = [4, 1], strides = [1, 1]} : vector<4x4xf32> to vector<4x1xf32>
    %313 = vector.extract_strided_slice %296 {offsets = [2, 0], sizes = [1, 256], strides = [1, 1]} : vector<4x256xf32> to vector<1x256xf32>
    %314 = vector.broadcast %312 : vector<4x1xf32> to vector<4x256xf32>
    %315 = vector.broadcast %313 : vector<1x256xf32> to vector<4x256xf32>
    %316 = arith.mulf %314, %315 : vector<4x256xf32>
    %317 = arith.addf %311, %316 : vector<4x256xf32>
    %318 = vector.extract_strided_slice %4 {offsets = [0, 3], sizes = [4, 1], strides = [1, 1]} : vector<4x4xf32> to vector<4x1xf32>
    %319 = vector.extract_strided_slice %296 {offsets = [3, 0], sizes = [1, 256], strides = [1, 1]} : vector<4x256xf32> to vector<1x256xf32>
    %320 = vector.broadcast %318 : vector<4x1xf32> to vector<4x256xf32>
    %321 = vector.broadcast %319 : vector<1x256xf32> to vector<4x256xf32>
    %322 = arith.mulf %320, %321 : vector<4x256xf32>
    %323 = arith.addf %317, %322 : vector<4x256xf32>
    %324 = arith.addf %323, %169 : vector<4x256xf32>
    %cst_158 = arith.constant 0.000000e+00 : f32
    %325 = vector.broadcast %cst_158 : f32 to vector<4x256xf32>
    %326 = arith.maximumf %324, %325 : vector<4x256xf32>
    %c1_159 = arith.constant 1 : index
    %c0_160 = arith.constant 0 : index
    %c0_161 = arith.constant 0 : index
    %327 = vector.load %arg10[%c1_159, %c0_160, %c0_161] : memref<2x4x256xf32, #tpu.memory_space<vmem>>, vector<1x4x256xf32>
    %328 = vector.shape_cast %327 : vector<1x4x256xf32> to vector<4x256xf32>
    %329 = vector.shape_cast %326 : vector<4x256xf32> to vector<1x4x256xf32>
    tpu.vector_store %arg10[%c1_159, %c0_160, %c0_161], %329 {strides = array<i32>} : memref<2x4x256xf32, #tpu.memory_space<vmem>>, vector<1x4x256xf32>,
    return
  }
  func.func @transform_0(%arg0: i32) -> (i32, i32, i32) {
    %c0_i32 = arith.constant 0 : i32
    %c0_i32_0 = arith.constant 0 : i32
    %c0_i32_1 = arith.constant 0 : i32
    return %arg0, %c0_i32, %c0_i32_0 : i32, i32, i32
  }
  func.func @transform_1(%arg0: i32) -> (i32, i32, i32) {
    %c0_i32 = arith.constant 0 : i32
    %c0_i32_0 = arith.constant 0 : i32
    %c0_i32_1 = arith.constant 0 : i32
    %c0_i32_2 = arith.constant 0 : i32
    return %c0_i32, %c0_i32_0, %c0_i32_1 : i32, i32, i32
  }
  func.func @transform_2(%arg0: i32) -> (i32, i32) {
    %c0_i32 = arith.constant 0 : i32
    %c0_i32_0 = arith.constant 0 : i32
    %c0_i32_1 = arith.constant 0 : i32
    return %c0_i32, %c0_i32_0 : i32, i32
  }
  func.func @transform_3(%arg0: i32) -> (i32, i32) {
    %c0_i32 = arith.constant 0 : i32
    %c0_i32_0 = arith.constant 0 : i32
    %c0_i32_1 = arith.constant 0 : i32
    return %c0_i32, %c0_i32_0 : i32, i32
  }
  func.func @transform_4(%arg0: i32) -> (i32, i32) {
    %c0_i32 = arith.constant 0 : i32
    %c0_i32_0 = arith.constant 0 : i32
    %c0_i32_1 = arith.constant 0 : i32
    return %c0_i32, %c0_i32_0 : i32, i32
  }
  func.func @transform_5(%arg0: i32) -> (i32, i32, i32) {
    %c0_i32 = arith.constant 0 : i32
    %c0_i32_0 = arith.constant 0 : i32
    %c0_i32_1 = arith.constant 0 : i32
    %c0_i32_2 = arith.constant 0 : i32
    return %c0_i32, %c0_i32_0, %c0_i32_1 : i32, i32, i32
  }
  func.func @transform_6(%arg0: i32) -> (i32, i32) {
    %c0_i32 = arith.constant 0 : i32
    %c0_i32_0 = arith.constant 0 : i32
    %c0_i32_1 = arith.constant 0 : i32
    return %c0_i32, %c0_i32_0 : i32, i32
  }
  func.func @transform_7(%arg0: i32) -> (i32, i32) {
    %c0_i32 = arith.constant 0 : i32
    %c0_i32_0 = arith.constant 0 : i32
    %c0_i32_1 = arith.constant 0 : i32
    return %c0_i32, %c0_i32_0 : i32, i32
  }
  func.func @transform_8(%arg0: i32) -> (i32, i32) {
    %c0_i32 = arith.constant 0 : i32
    %c0_i32_0 = arith.constant 0 : i32
    %c0_i32_1 = arith.constant 0 : i32
    return %c0_i32, %c0_i32_0 : i32, i32
  }
  func.func @transform_9(%arg0: i32) -> (i32, i32, i32) {
    %c0_i32 = arith.constant 0 : i32
    %c0_i32_0 = arith.constant 0 : i32
    %c0_i32_1 = arith.constant 0 : i32
    return %arg0, %c0_i32, %c0_i32_0 : i32, i32, i32
  }
}

</mosaic_0001>

<llo_original>
// kernel: tpu_custom_call.1
$region0: #{tpu_custom_call.1}
  #allocation0 [shape = 'u32[]', space=smem, size = 0x4, offset = 0x4, fixed_abs, tag = 'smem constant byte address 0x4 - core index']
  #allocation1 [shape = 'u32[144,128]{1,0:T(1,128)}', space=vmem, size = 0x12000, scoped, tag = 'internal scratch']
  %s0 = inlined_call_operand.vmem [shape: f32[2,4,256], index: 0, kind: input, shape index: {}]
  %s1 = inlined_call_operand.hbm [shape: f32[9,4,256], index: 1, kind: input, shape index: {}]
  %s2 = inlined_call_operand.vmem [shape: f32[4,1], index: 2, kind: input, shape index: {}]
  %s3 = inlined_call_operand.vmem [shape: f32[4,4], index: 3, kind: input, shape index: {}]
  %s4 = inlined_call_operand.vmem [shape: f32[4,1], index: 4, kind: input, shape index: {}]
  %s5 = inlined_call_operand.hbm [shape: f32[9,4,256], index: 5, kind: input, shape index: {}]
  %s6 = inlined_call_operand.vmem [shape: f32[4,1], index: 6, kind: input, shape index: {}]
  %s7 = inlined_call_operand.vmem [shape: f32[4,4], index: 7, kind: input, shape index: {}]
  %s8 = inlined_call_operand.vmem [shape: f32[4,1], index: 8, kind: input, shape index: {}]
  %s9 = inlined_call_operand.hbm [shape: f32[2,4,256], index: 9, kind: output, shape index: {}]
  %s10 = sld [smem:[#allocation0]]
  $region54: #{tpu_custom_call.1} parent=0
    _
  %s12 = ssub.s32 1, %s10
  %s13 = scalar_select 0, %s12, %s10
  $region1: #{tpu_custom_call.1} parent=0
    #allocation2 [shape = 'u8[36864]{0}', space=vmem, size = 0x9000, scoped, tag = 'input window, operand 1, single buffered']
    #allocation3 [shape = 's32[1]{0}', space=sflag, size = 0x4, scoped, tag = 'scoped memory for tpu_custom_call.1']
    #allocation4 [shape = 's32[1]{0}', space=sflag, size = 0x4, scoped, tag = 'scoped memory for tpu_custom_call.1']
    #allocation5 [shape = 'u8[36864]{0}', space=vmem, size = 0x9000, scoped, tag = 'input window, operand 5, single buffered']
    #allocation6 [shape = 's32[1]{0}', space=sflag, size = 0x4, scoped, tag = 'scoped memory for tpu_custom_call.1']
    #allocation7 [shape = 'u8[8192]{0}', space=vmem, size = 0x2000, scoped, tag = 'output window, operand 0, single buffered']
    %14 = vsyncpa [#allocation3], 0
    %15 = vsyncpa [#allocation6], 0
    %16 = vsyncpa [#allocation4], 0
    // Predicated region
    $region2: #{tpu_custom_call.1} parent=1 // pred_check
      _
    $region3: #{tpu_custom_call.1} parent=1 // pred_check_branch
      %18 = sbr.rel (0) target = $region5
    $region4: #{tpu_custom_call.1} parent=1 // pred_region
      _
    $region5: #{tpu_custom_call.1} parent=1 // pred_fallthru
      _
    // Predicated region
    $region6: #{tpu_custom_call.1} parent=1 // pred_check
      _
    $region7: #{tpu_custom_call.1} parent=1 // pred_check_branch
      %20 = sbr.rel (0) target = $region9
    $region8: #{tpu_custom_call.1} parent=1 // pred_region
      %s22 = ssub.s32 1152, 1152
      %23 = vsyncadd [#allocation3], %s22
      %s24 = sshll.u32 [#allocation2], 4
      %s25 = int_to_ptr.vmem [resolvable:$true] %s24
      %30 = dma.hbm_to_vmem [thread:$0]  %s1, 1152, %s25, [#allocation3], 128, 128, 8
    $region9: #{tpu_custom_call.1} parent=1 // pred_fallthru
      _
    // Predicated region
    $region10: #{tpu_custom_call.1} parent=1 // pred_check
      _
    $region11: #{tpu_custom_call.1} parent=1 // pred_check_branch
      %32 = sbr.rel (0) target = $region13
    $region12: #{tpu_custom_call.1} parent=1 // pred_region
      _
    $region13: #{tpu_custom_call.1} parent=1 // pred_fallthru
      _
    // Predicated region
    $region14: #{tpu_custom_call.1} parent=1 // pred_check
      _
    $region15: #{tpu_custom_call.1} parent=1 // pred_check_branch
      %34 = sbr.rel (0) target = $region17
    $region16: #{tpu_custom_call.1} parent=1 // pred_region
      _
    $region17: #{tpu_custom_call.1} parent=1 // pred_fallthru
      _
    // Predicated region
    $region18: #{tpu_custom_call.1} parent=1 // pred_check
      _
    $region19: #{tpu_custom_call.1} parent=1 // pred_check_branch
      %36 = sbr.rel (0) target = $region21
    $region20: #{tpu_custom_call.1} parent=1 // pred_region
      _
    $region21: #{tpu_custom_call.1} parent=1 // pred_fallthru
      _
    // Predicated region
    $region22: #{tpu_custom_call.1} parent=1 // pred_check
      _
    $region23: #{tpu_custom_call.1} parent=1 // pred_check_branch
      %38 = sbr.rel (0) target = $region25
    $region24: #{tpu_custom_call.1} parent=1 // pred_region
      %s40 = ssub.s32 1152, 1152
      %41 = vsyncadd [#allocation6], %s40
      %s42 = sshll.u32 [#allocation5], 4
      %s43 = int_to_ptr.vmem [resolvable:$true] %s42
      %48 = dma.hbm_to_vmem [thread:$0]  %s5, 1152, %s43, [#allocation6], 128, 128, 8
    $region25: #{tpu_custom_call.1} parent=1 // pred_fallthru
      _
    // Predicated region
    $region26: #{tpu_custom_call.1} parent=1 // pred_check
      _
    $region27: #{tpu_custom_call.1} parent=1 // pred_check_branch
      %50 = sbr.rel (0) target = $region29
    $region28: #{tpu_custom_call.1} parent=1 // pred_region
      _
    $region29: #{tpu_custom_call.1} parent=1 // pred_fallthru
      _
    // Predicated region
    $region30: #{tpu_custom_call.1} parent=1 // pred_check
      _
    $region31: #{tpu_custom_call.1} parent=1 // pred_check_branch
      %52 = sbr.rel (0) target = $region33
    $region32: #{tpu_custom_call.1} parent=1 // pred_region
      _
    $region33: #{tpu_custom_call.1} parent=1 // pred_fallthru
      _
    // Predicated region
    $region34: #{tpu_custom_call.1} parent=1 // pred_check
      _
    $region35: #{tpu_custom_call.1} parent=1 // pred_check_branch
      %54 = sbr.rel (0) target = $region37
    $region36: #{tpu_custom_call.1} parent=1 // pred_region
      _
    $region37: #{tpu_custom_call.1} parent=1 // pred_fallthru
      _
    // Predicated region
    $region38: #{tpu_custom_call.1} parent=1 // pred_check
      _
    $region39: #{tpu_custom_call.1} parent=1 // pred_check_branch
      %56 = sbr.rel (0) target = $region41
    $region40: #{tpu_custom_call.1} parent=1 // pred_region
      %57 = dma.done [#allocation3], 1152
    $region41: #{tpu_custom_call.1} parent=1 // pred_fallthru
      _
    // Predicated region
    $region42: #{tpu_custom_call.1} parent=1 // pred_check
      _
    $region43: #{tpu_custom_call.1} parent=1 // pred_check_branch
      %59 = sbr.rel (0) target = $region45
    $region44: #{tpu_custom_call.1} parent=1 // pred_region
      %60 = dma.done [#allocation6], 1152
    $region45: #{tpu_custom_call.1} parent=1 // pred_fallthru
      _
    %v61 = vld [vmem:[%s2] sm:$0xf]
    %v62 = vld [vmem:[%s3] sm:$0xf]
    %v63 = vld [vmem:[%s4] sm:$0xf]
    %v64 = vld [vmem:[%s6] sm:$0xf]
    %v65 = vld [vmem:[%s7] sm:$0xf]
    %v66 = vld [vmem:[%s8] sm:$0xf]
    %v67 = vld [vmem:[%s0] sm:$0xff]
    %69 = vset.pattern.permute.xlu0 0
    %70 = vperm.xlu0 %69, %v61
    %v71 = vpop.permute.xlu0 %70
    %v73 = vadd.f32 %v71, 0.0
    %v75 = vcombine.high %v67, %v67
    %77 = vrot.lane.b32.xlu0 %v67, 17
    %v78 = vpop.permute.xlu0 %77
    %79 = vrot.lane.b32.xlu0 %v75, 17
    %v80 = vpop.permute.xlu0 %79
    %v81 = vlaneseq
    %v82 = vand.u32 %v81, 127
    %vm83 = vcmp.lt.s32.totalorder %v82, 17
    %v84 = vsel %vm83, %v78, %v80
    %v85 = vsel %vm83, %v80, %v78
    %v86 = vld [vmem:[#allocation2] sm:$0xff]
    %v89 = vcombine.low %v85, %v84
    %v91 = vmul.f32 %v86, %v89
    %v93 = vcombine.high %v91, %v91
    %v95 = vadd.f32 %v73, %v91
    %v96 = vadd.f32 %v73, %v93
    %97 = vrot.lane.b32.xlu0 %v67, 16
    %v98 = vpop.permute.xlu0 %97
    %99 = vrot.lane.b32.xlu0 %v75, 16
    %v100 = vpop.permute.xlu0 %99
    %vm101 = vcmp.lt.s32.totalorder %v82, 16
    %v102 = vsel %vm101, %v98, %v100
    %v103 = vsel %vm101, %v100, %v98
    %s104 = scalar_lea.vmem [#allocation2], 8
    %v105 = vld [vmem:[%s104] sm:$0xff]
    %v108 = vcombine.low %v103, %v102
    %v110 = vmul.f32 %v105, %v108
    %v112 = vcombine.high %v110, %v110
    %v114 = vadd.f32 %v95, %v110
    %v115 = vadd.f32 %v96, %v112
    %116 = vrot.lane.b32.xlu0 %v67, 15
    %v117 = vpop.permute.xlu0 %116
    %118 = vrot.lane.b32.xlu0 %v75, 15
    %v119 = vpop.permute.xlu0 %118
    %vm120 = vcmp.lt.s32.totalorder %v82, 15
    %v121 = vsel %vm120, %v117, %v119
    %v122 = vsel %vm120, %v119, %v117
    %s123 = scalar_lea.vmem [#allocation2], 16
    %v124 = vld [vmem:[%s123] sm:$0xff]
    %v127 = vcombine.low %v122, %v121
    %v129 = vmul.f32 %v124, %v127
    %v131 = vcombine.high %v129, %v129
    %v133 = vadd.f32 %v114, %v129
    %v134 = vadd.f32 %v115, %v131
    %135 = vrot.lane.b32.xlu0 %v67, 1
    %v136 = vpop.permute.xlu0 %135
    %137 = vrot.lane.b32.xlu0 %v75, 1
    %v138 = vpop.permute.xlu0 %137
    %vm139 = vcmp.lt.s32.totalorder %v82, 1
    %v140 = vsel %vm139, %v136, %v138
    %v141 = vsel %vm139, %v138, %v136
    %s142 = scalar_lea.vmem [#allocation2], 24
    %v143 = vld [vmem:[%s142] sm:$0xff]
    %v146 = vcombine.low %v141, %v140
    %v148 = vmul.f32 %v143, %v146
    %v150 = vcombine.high %v148, %v148
    %v152 = vadd.f32 %v133, %v148
    %v153 = vadd.f32 %v134, %v150
    %s154 = scalar_lea.vmem [#allocation2], 32
    %v155 = vld [vmem:[%s154] sm:$0xff]
    %v156 = vmul.f32 %v155, %v67
    %v158 = vcombine.high %v156, %v156
    %v160 = vadd.f32 %v152, %v156
    %v161 = vadd.f32 %v153, %v158
    %162 = vrot.lane.b32.xlu0 %v67, 127
    %v163 = vpop.permute.xlu0 %162
    %164 = vrot.lane.b32.xlu0 %v75, 127
    %v165 = vpop.permute.xlu0 %164
    %vm166 = vcmp.lt.s32.totalorder %v82, 127
    %v167 = vsel %vm166, %v163, %v165
    %v168 = vsel %vm166, %v165, %v163
    %s169 = scalar_lea.vmem [#allocation2], 40
    %v170 = vld [vmem:[%s169] sm:$0xff]
    %v173 = vcombine.low %v167, %v168
    %v175 = vmul.f32 %v170, %v173
    %v177 = vcombine.high %v175, %v175
    %v179 = vadd.f32 %v160, %v175
    %v180 = vadd.f32 %v161, %v177
    %181 = vrot.lane.b32.xlu0 %v67, 113
    %v182 = vpop.permute.xlu0 %181
    %183 = vrot.lane.b32.xlu0 %v75, 113
    %v184 = vpop.permute.xlu0 %183
    %vm185 = vcmp.lt.s32.totalorder %v82, 113
    %v186 = vsel %vm185, %v182, %v184
    %v187 = vsel %vm185, %v184, %v182
    %s188 = scalar_lea.vmem [#allocation2], 48
    %v189 = vld [vmem:[%s188] sm:$0xff]
    %v192 = vcombine.low %v186, %v187
    %v194 = vmul.f32 %v189, %v192
    %v196 = vcombine.high %v194, %v194
    %v198 = vadd.f32 %v179, %v194
    %v199 = vadd.f32 %v180, %v196
    %200 = vrot.lane.b32.xlu0 %v67, 112
    %v201 = vpop.permute.xlu0 %200
    %202 = vrot.lane.b32.xlu0 %v75, 112
    %v203 = vpop.permute.xlu0 %202
    %vm204 = vcmp.lt.s32.totalorder %v82, 112
    %v205 = vsel %vm204, %v201, %v203
    %v206 = vsel %vm204, %v203, %v201
    %s207 = scalar_lea.vmem [#allocation2], 56
    %v208 = vld [vmem:[%s207] sm:$0xff]
    %v211 = vcombine.low %v205, %v206
    %v213 = vmul.f32 %v208, %v211
    %v215 = vcombine.high %v213, %v213
    %v217 = vadd.f32 %v198, %v213
    %v218 = vadd.f32 %v199, %v215
    %219 = vrot.lane.b32.xlu0 %v67, 111
    %v220 = vpop.permute.xlu0 %219
    %221 = vrot.lane.b32.xlu0 %v75, 111
    %v222 = vpop.permute.xlu0 %221
    %vm223 = vcmp.lt.s32.totalorder %v82, 111
    %v224 = vsel %vm223, %v220, %v222
    %v225 = vsel %vm223, %v222, %v220
    %s226 = scalar_lea.vmem [#allocation2], 64
    %v227 = vld [vmem:[%s226] sm:$0xff]
    %v230 = vcombine.low %v224, %v225
    %v232 = vmul.f32 %v227, %v230
    %v234 = vcombine.high %v232, %v232
    %v236 = vadd.f32 %v217, %v232
    %v237 = vadd.f32 %v218, %v234
    %v238 = vmax.f32 %v236, 0.0
    %v239 = vmax.f32 %v237, 0.0
    %241 = vset.pattern.permute.xlu0 0
    %242 = vperm.xlu0 %241, %v63
    %v243 = vpop.permute.xlu0 %242
    %v245 = vadd.f32 %v243, 0.0
    %247 = vset.pattern.permute.xlu0 0
    %248 = vperm.xlu0 %247, %v62
    %v249 = vpop.permute.xlu0 %248
    %v251 = vlaneseq
    %v252 = vshrl.u32 %v251, 7
    %v253 = vsub.s32 0, %v252
    %v254 = vrot.slane %v238, %v253
    %v255 = vlaneseq
    %v256 = vshrl.u32 %v255, 7
    %v257 = vsub.s32 0, %v256
    %v258 = vrot.slane %v239, %v257
    %v259 = vmul.f32 %v249, %v254
    %v260 = vmul.f32 %v249, %v258
    %v261 = vadd.f32 %v245, %v259
    %v262 = vadd.f32 %v245, %v260
    %263 = vset.pattern.permute.xlu0 1
    %264 = vperm.xlu0 %263, %v62
    %v265 = vpop.permute.xlu0 %264
    %v267 = vlaneseq
    %v268 = vshrl.u32 %v267, 7
    %v269 = vsub.s32 1, %v268
    %v270 = vrot.slane %v238, %v269
    %v271 = vlaneseq
    %v272 = vshrl.u32 %v271, 7
    %v273 = vsub.s32 1, %v272
    %v274 = vrot.slane %v239, %v273
    %v275 = vmul.f32 %v265, %v270
    %v276 = vmul.f32 %v265, %v274
    %v277 = vadd.f32 %v261, %v275
    %v278 = vadd.f32 %v262, %v276
    %279 = vset.pattern.permute.xlu0 2
    %280 = vperm.xlu0 %279, %v62
    %v281 = vpop.permute.xlu0 %280
    %v283 = vlaneseq
    %v284 = vshrl.u32 %v283, 7
    %v285 = vsub.s32 2, %v284
    %v286 = vrot.slane %v238, %v285
    %v287 = vlaneseq
    %v288 = vshrl.u32 %v287, 7
    %v289 = vsub.s32 2, %v288
    %v290 = vrot.slane %v239, %v289
    %v291 = vmul.f32 %v281, %v286
    %v292 = vmul.f32 %v281, %v290
    %v293 = vadd.f32 %v277, %v291
    %v294 = vadd.f32 %v278, %v292
    %295 = vset.pattern.permute.xlu0 3
    %296 = vperm.xlu0 %295, %v62
    %v297 = vpop.permute.xlu0 %296
    %v299 = vlaneseq
    %v300 = vshrl.u32 %v299, 7
    %v301 = vsub.s32 3, %v300
    %v302 = vrot.slane %v238, %v301
    %v303 = vlaneseq
    %v304 = vshrl.u32 %v303, 7
    %v305 = vsub.s32 3, %v304
    %v306 = vrot.slane %v239, %v305
    %v307 = vmul.f32 %v297, %v302
    %v308 = vmul.f32 %v297, %v306
    %v309 = vadd.f32 %v293, %v307
    %v310 = vadd.f32 %v294, %v308
    %v311 = vmax.f32 %v309, 0.0
    %v312 = vmax.f32 %v310, 0.0
    %314 = vset.pattern.permute.xlu0 0
    %315 = vperm.xlu0 %314, %v64
    %v316 = vpop.permute.xlu0 %315
    %v318 = vadd.f32 %v316, 0.0
    %319 = vrot.lane.b32.xlu0 %v311, 17
    %v320 = vpop.permute.xlu0 %319
    %321 = vrot.lane.b32.xlu0 %v312, 17
    %v322 = vpop.permute.xlu0 %321
    %v323 = vsel %vm83, %v320, %v322
    %v324 = vsel %vm83, %v322, %v320
    %v325 = vld [vmem:[#allocation5] sm:$0xff]
    %v328 = vcombine.low %v324, %v323
    %v330 = vmul.f32 %v325, %v328
    %v332 = vcombine.high %v330, %v330
    %v334 = vadd.f32 %v318, %v330
    %v335 = vadd.f32 %v318, %v332
    %336 = vrot.lane.b32.xlu0 %v311, 16
    %v337 = vpop.permute.xlu0 %336
    %338 = vrot.lane.b32.xlu0 %v312, 16
    %v339 = vpop.permute.xlu0 %338
    %v340 = vsel %vm101, %v337, %v339
    %v341 = vsel %vm101, %v339, %v337
    %s342 = scalar_lea.vmem [#allocation5], 8
    %v343 = vld [vmem:[%s342] sm:$0xff]
    %v346 = vcombine.low %v341, %v340
    %v348 = vmul.f32 %v343, %v346
    %v350 = vcombine.high %v348, %v348
    %v352 = vadd.f32 %v334, %v348
    %v353 = vadd.f32 %v335, %v350
    %354 = vrot.lane.b32.xlu0 %v311, 15
    %v355 = vpop.permute.xlu0 %354
    %356 = vrot.lane.b32.xlu0 %v312, 15
    %v357 = vpop.permute.xlu0 %356
    %v358 = vsel %vm120, %v355, %v357
    %v359 = vsel %vm120, %v357, %v355
    %s360 = scalar_lea.vmem [#allocation5], 16
    %v361 = vld [vmem:[%s360] sm:$0xff]
    %v364 = vcombine.low %v359, %v358
    %v366 = vmul.f32 %v361, %v364
    %v368 = vcombine.high %v366, %v366
    %v370 = vadd.f32 %v352, %v366
    %v371 = vadd.f32 %v353, %v368
    %372 = vrot.lane.b32.xlu0 %v311, 1
    %v373 = vpop.permute.xlu0 %372
    %374 = vrot.lane.b32.xlu0 %v312, 1
    %v375 = vpop.permute.xlu0 %374
    %v376 = vsel %vm139, %v373, %v375
    %v377 = vsel %vm139, %v375, %v373
    %s378 = scalar_lea.vmem [#allocation5], 24
    %v379 = vld [vmem:[%s378] sm:$0xff]
    %v382 = vcombine.low %v377, %v376
    %v384 = vmul.f32 %v379, %v382
    %v386 = vcombine.high %v384, %v384
    %v388 = vadd.f32 %v370, %v384
    %v389 = vadd.f32 %v371, %v386
    %s390 = scalar_lea.vmem [#allocation5], 32
    %v391 = vld [vmem:[%s390] sm:$0xff]
    %v394 = vcombine.low %v311, %v312
    %v396 = vmul.f32 %v391, %v394
    %v398 = vcombine.high %v396, %v396
    %v400 = vadd.f32 %v388, %v396
    %v401 = vadd.f32 %v389, %v398
    %402 = vrot.lane.b32.xlu0 %v311, 127
    %v403 = vpop.permute.xlu0 %402
    %404 = vrot.lane.b32.xlu0 %v312, 127
    %v405 = vpop.permute.xlu0 %404
    %v406 = vsel %vm166, %v403, %v405
    %v407 = vsel %vm166, %v405, %v403
    %s408 = scalar_lea.vmem [#allocation5], 40
    %v409 = vld [vmem:[%s408] sm:$0xff]
    %v412 = vcombine.low %v406, %v407
    %v414 = vmul.f32 %v409, %v412
    %v416 = vcombine.high %v414, %v414
    %v418 = vadd.f32 %v400, %v414
    %v419 = vadd.f32 %v401, %v416
    %420 = vrot.lane.b32.xlu0 %v311, 113
    %v421 = vpop.permute.xlu0 %420
    %422 = vrot.lane.b32.xlu0 %v312, 113
    %v423 = vpop.permute.xlu0 %422
    %v424 = vsel %vm185, %v421, %v423
    %v425 = vsel %vm185, %v423, %v421
    %s426 = scalar_lea.vmem [#allocation5], 48
    %v427 = vld [vmem:[%s426] sm:$0xff]
    %v430 = vcombine.low %v424, %v425
    %v432 = vmul.f32 %v427, %v430
    %v434 = vcombine.high %v432, %v432
    %v436 = vadd.f32 %v418, %v432
    %v437 = vadd.f32 %v419, %v434
    %438 = vrot.lane.b32.xlu0 %v311, 112
    %v439 = vpop.permute.xlu0 %438
    %440 = vrot.lane.b32.xlu0 %v312, 112
    %v441 = vpop.permute.xlu0 %440
    %v442 = vsel %vm204, %v439, %v441
    %v443 = vsel %vm204, %v441, %v439
    %s444 = scalar_lea.vmem [#allocation5], 56
    %v445 = vld [vmem:[%s444] sm:$0xff]
    %v448 = vcombine.low %v442, %v443
    %v450 = vmul.f32 %v445, %v448
    %v452 = vcombine.high %v450, %v450
    %v454 = vadd.f32 %v436, %v450
    %v455 = vadd.f32 %v437, %v452
    %456 = vrot.lane.b32.xlu0 %v311, 111
    %v457 = vpop.permute.xlu0 %456
    %458 = vrot.lane.b32.xlu0 %v312, 111
    %v459 = vpop.permute.xlu0 %458
    %v460 = vsel %vm223, %v457, %v459
    %v461 = vsel %vm223, %v459, %v457
    %s462 = scalar_lea.vmem [#allocation5], 64
    %v463 = vld [vmem:[%s462] sm:$0xff]
    %v466 = vcombine.low %v460, %v461
    %v468 = vmul.f32 %v463, %v466
    %v470 = vcombine.high %v468, %v468
    %v472 = vadd.f32 %v454, %v468
    %v473 = vadd.f32 %v455, %v470
    %v474 = vmax.f32 %v472, 0.0
    %v475 = vmax.f32 %v473, 0.0
    %477 = vset.pattern.permute.xlu0 0
    %478 = vperm.xlu0 %477, %v66
    %v479 = vpop.permute.xlu0 %478
    %v481 = vadd.f32 %v479, 0.0
    %483 = vset.pattern.permute.xlu0 0
    %484 = vperm.xlu0 %483, %v65
    %v485 = vpop.permute.xlu0 %484
    %v487 = vlaneseq
    %v488 = vshrl.u32 %v487, 7
    %v489 = vsub.s32 0, %v488
    %v490 = vrot.slane %v474, %v489
    %v491 = vlaneseq
    %v492 = vshrl.u32 %v491, 7
    %v493 = vsub.s32 0, %v492
    %v494 = vrot.slane %v475, %v493
    %v495 = vmul.f32 %v485, %v490
    %v496 = vmul.f32 %v485, %v494
    %v497 = vadd.f32 %v481, %v495
    %v498 = vadd.f32 %v481, %v496
    %499 = vset.pattern.permute.xlu0 1
    %500 = vperm.xlu0 %499, %v65
    %v501 = vpop.permute.xlu0 %500
    %v503 = vlaneseq
    %v504 = vshrl.u32 %v503, 7
    %v505 = vsub.s32 1, %v504
    %v506 = vrot.slane %v474, %v505
    %v507 = vlaneseq
    %v508 = vshrl.u32 %v507, 7
    %v509 = vsub.s32 1, %v508
    %v510 = vrot.slane %v475, %v509
    %v511 = vmul.f32 %v501, %v506
    %v512 = vmul.f32 %v501, %v510
    %v513 = vadd.f32 %v497, %v511
    %v514 = vadd.f32 %v498, %v512
    %515 = vset.pattern.permute.xlu0 2
    %516 = vperm.xlu0 %515, %v65
    %v517 = vpop.permute.xlu0 %516
    %v519 = vlaneseq
    %v520 = vshrl.u32 %v519, 7
    %v521 = vsub.s32 2, %v520
    %v522 = vrot.slane %v474, %v521
    %v523 = vlaneseq
    %v524 = vshrl.u32 %v523, 7
    %v525 = vsub.s32 2, %v524
    %v526 = vrot.slane %v475, %v525
    %v527 = vmul.f32 %v517, %v522
    %v528 = vmul.f32 %v517, %v526
    %v529 = vadd.f32 %v513, %v527
    %v530 = vadd.f32 %v514, %v528
    %531 = vset.pattern.permute.xlu0 3
    %532 = vperm.xlu0 %531, %v65
    %v533 = vpop.permute.xlu0 %532
    %v535 = vlaneseq
    %v536 = vshrl.u32 %v535, 7
    %v537 = vsub.s32 3, %v536
    %v538 = vrot.slane %v474, %v537
    %v539 = vlaneseq
    %v540 = vshrl.u32 %v539, 7
    %v541 = vsub.s32 3, %v540
    %v542 = vrot.slane %v475, %v541
    %v543 = vmul.f32 %v533, %v538
    %v544 = vmul.f32 %v533, %v542
    %v545 = vadd.f32 %v529, %v543
    %v546 = vadd.f32 %v530, %v544
    %v547 = vadd.f32 %v545, %v67
    %v548 = vadd.f32 %v546, %v75
    %v549 = vmax.f32 %v547, 0.0
    %v550 = vmax.f32 %v548, 0.0
    %v553 = vcombine.low %v549, %v550
    %555 = vst [vmem:[#allocation7] sm:$0xff] %v553
    %s556 = scalar_lea.vmem %s0, 8
    %v557 = vld [vmem:[%s556] sm:$0xff]
    %v559 = vcombine.high %v557, %v557
    %561 = vrot.lane.b32.xlu0 %v557, 17
    %v562 = vpop.permute.xlu0 %561
    %563 = vrot.lane.b32.xlu0 %v559, 17
    %v564 = vpop.permute.xlu0 %563
    %v565 = vsel %vm83, %v562, %v564
    %v566 = vsel %vm83, %v564, %v562
    %v567 = vld [vmem:[#allocation2] sm:$0xff]
    %v570 = vcombine.low %v566, %v565
    %v572 = vmul.f32 %v567, %v570
    %v574 = vcombine.high %v572, %v572
    %v576 = vadd.f32 %v73, %v572
    %v577 = vadd.f32 %v73, %v574
    %578 = vrot.lane.b32.xlu0 %v557, 16
    %v579 = vpop.permute.xlu0 %578
    %580 = vrot.lane.b32.xlu0 %v559, 16
    %v581 = vpop.permute.xlu0 %580
    %v582 = vsel %vm101, %v579, %v581
    %v583 = vsel %vm101, %v581, %v579
    %v584 = vld [vmem:[%s104] sm:$0xff]
    %v587 = vcombine.low %v583, %v582
    %v589 = vmul.f32 %v584, %v587
    %v591 = vcombine.high %v589, %v589
    %v593 = vadd.f32 %v576, %v589
    %v594 = vadd.f32 %v577, %v591
    %595 = vrot.lane.b32.xlu0 %v557, 15
    %v596 = vpop.permute.xlu0 %595
    %597 = vrot.lane.b32.xlu0 %v559, 15
    %v598 = vpop.permute.xlu0 %597
    %v599 = vsel %vm120, %v596, %v598
    %v600 = vsel %vm120, %v598, %v596
    %v601 = vld [vmem:[%s123] sm:$0xff]
    %v604 = vcombine.low %v600, %v599
    %v606 = vmul.f32 %v601, %v604
    %v608 = vcombine.high %v606, %v606
    %v610 = vadd.f32 %v593, %v606
    %v611 = vadd.f32 %v594, %v608
    %612 = vrot.lane.b32.xlu0 %v557, 1
    %v613 = vpop.permute.xlu0 %612
    %614 = vrot.lane.b32.xlu0 %v559, 1
    %v615 = vpop.permute.xlu0 %614
    %v616 = vsel %vm139, %v613, %v615
    %v617 = vsel %vm139, %v615, %v613
    %v618 = vld [vmem:[%s142] sm:$0xff]
    %v621 = vcombine.low %v617, %v616
    %v623 = vmul.f32 %v618, %v621
    %v625 = vcombine.high %v623, %v623
    %v627 = vadd.f32 %v610, %v623
    %v628 = vadd.f32 %v611, %v625
    %v629 = vld [vmem:[%s154] sm:$0xff]
    %v630 = vmul.f32 %v629, %v557
    %v632 = vcombine.high %v630, %v630
    %v634 = vadd.f32 %v627, %v630
    %v635 = vadd.f32 %v628, %v632
    %636 = vrot.lane.b32.xlu0 %v557, 127
    %v637 = vpop.permute.xlu0 %636
    %638 = vrot.lane.b32.xlu0 %v559, 127
    %v639 = vpop.permute.xlu0 %638
    %v640 = vsel %vm166, %v637, %v639
    %v641 = vsel %vm166, %v639, %v637
    %v642 = vld [vmem:[%s169] sm:$0xff]
    %v645 = vcombine.low %v640, %v641
    %v647 = vmul.f32 %v642, %v645
    %v649 = vcombine.high %v647, %v647
    %v651 = vadd.f32 %v634, %v647
    %v652 = vadd.f32 %v635, %v649
    %653 = vrot.lane.b32.xlu0 %v557, 113
    %v654 = vpop.permute.xlu0 %653
    %655 = vrot.lane.b32.xlu0 %v559, 113
    %v656 = vpop.permute.xlu0 %655
    %v657 = vsel %vm185, %v654, %v656
    %v658 = vsel %vm185, %v656, %v654
    %v659 = vld [vmem:[%s188] sm:$0xff]
    %v662 = vcombine.low %v657, %v658
    %v664 = vmul.f32 %v659, %v662
    %v666 = vcombine.high %v664, %v664
    %v668 = vadd.f32 %v651, %v664
    %v669 = vadd.f32 %v652, %v666
    %670 = vrot.lane.b32.xlu0 %v557, 112
    %v671 = vpop.permute.xlu0 %670
    %672 = vrot.lane.b32.xlu0 %v559, 112
    %v673 = vpop.permute.xlu0 %672
    %v674 = vsel %vm204, %v671, %v673
    %v675 = vsel %vm204, %v673, %v671
    %v676 = vld [vmem:[%s207] sm:$0xff]
    %v679 = vcombine.low %v674, %v675
    %v681 = vmul.f32 %v676, %v679
    %v683 = vcombine.high %v681, %v681
    %v685 = vadd.f32 %v668, %v681
    %v686 = vadd.f32 %v669, %v683
    %687 = vrot.lane.b32.xlu0 %v557, 111
    %v688 = vpop.permute.xlu0 %687
    %689 = vrot.lane.b32.xlu0 %v559, 111
    %v690 = vpop.permute.xlu0 %689
    %v691 = vsel %vm223, %v688, %v690
    %v692 = vsel %vm223, %v690, %v688
    %v693 = vld [vmem:[%s226] sm:$0xff]
    %v696 = vcombine.low %v691, %v692
    %v698 = vmul.f32 %v693, %v696
    %v700 = vcombine.high %v698, %v698
    %v702 = vadd.f32 %v685, %v698
    %v703 = vadd.f32 %v686, %v700
    %v704 = vmax.f32 %v702, 0.0
    %v705 = vmax.f32 %v703, 0.0
    %v706 = vlaneseq
    %v707 = vshrl.u32 %v706, 7
    %v708 = vsub.s32 0, %v707
    %v709 = vrot.slane %v704, %v708
    %v710 = vlaneseq
    %v711 = vshrl.u32 %v710, 7
    %v712 = vsub.s32 0, %v711
    %v713 = vrot.slane %v705, %v712
    %v714 = vmul.f32 %v249, %v709
    %v715 = vmul.f32 %v249, %v713
    %v716 = vadd.f32 %v245, %v714
    %v717 = vadd.f32 %v245, %v715
    %v718 = vlaneseq
    %v719 = vshrl.u32 %v718, 7
    %v720 = vsub.s32 1, %v719
    %v721 = vrot.slane %v704, %v720
    %v722 = vlaneseq
    %v723 = vshrl.u32 %v722, 7
    %v724 = vsub.s32 1, %v723
    %v725 = vrot.slane %v705, %v724
    %v726 = vmul.f32 %v265, %v721
    %v727 = vmul.f32 %v265, %v725
    %v728 = vadd.f32 %v716, %v726
    %v729 = vadd.f32 %v717, %v727
    %v730 = vlaneseq
    %v731 = vshrl.u32 %v730, 7
    %v732 = vsub.s32 2, %v731
    %v733 = vrot.slane %v704, %v732
    %v734 = vlaneseq
    %v735 = vshrl.u32 %v734, 7
    %v736 = vsub.s32 2, %v735
    %v737 = vrot.slane %v705, %v736
    %v738 = vmul.f32 %v281, %v733
    %v739 = vmul.f32 %v281, %v737
    %v740 = vadd.f32 %v728, %v738
    %v741 = vadd.f32 %v729, %v739
    %v742 = vlaneseq
    %v743 = vshrl.u32 %v742, 7
    %v744 = vsub.s32 3, %v743
    %v745 = vrot.slane %v704, %v744
    %v746 = vlaneseq
    %v747 = vshrl.u32 %v746, 7
    %v748 = vsub.s32 3, %v747
    %v749 = vrot.slane %v705, %v748
    %v750 = vmul.f32 %v297, %v745
    %v751 = vmul.f32 %v297, %v749
    %v752 = vadd.f32 %v740, %v750
    %v753 = vadd.f32 %v741, %v751
    %v754 = vmax.f32 %v752, 0.0
    %v755 = vmax.f32 %v753, 0.0
    %756 = vrot.lane.b32.xlu0 %v754, 17
    %v757 = vpop.permute.xlu0 %756
    %758 = vrot.lane.b32.xlu0 %v755, 17
    %v759 = vpop.permute.xlu0 %758
    %v760 = vsel %vm83, %v757, %v759
    %v761 = vsel %vm83, %v759, %v757
    %v762 = vld [vmem:[#allocation5] sm:$0xff]
    %v765 = vcombine.low %v761, %v760
    %v767 = vmul.f32 %v762, %v765
    %v769 = vcombine.high %v767, %v767
    %v771 = vadd.f32 %v318, %v767
    %v772 = vadd.f32 %v318, %v769
    %773 = vrot.lane.b32.xlu0 %v754, 16
    %v774 = vpop.permute.xlu0 %773
    %775 = vrot.lane.b32.xlu0 %v755, 16
    %v776 = vpop.permute.xlu0 %775
    %v777 = vsel %vm101, %v774, %v776
    %v778 = vsel %vm101, %v776, %v774
    %v779 = vld [vmem:[%s342] sm:$0xff]
    %v782 = vcombine.low %v778, %v777
    %v784 = vmul.f32 %v779, %v782
    %v786 = vcombine.high %v784, %v784
    %v788 = vadd.f32 %v771, %v784
    %v789 = vadd.f32 %v772, %v786
    %790 = vrot.lane.b32.xlu0 %v754, 15
    %v791 = vpop.permute.xlu0 %790
    %792 = vrot.lane.b32.xlu0 %v755, 15
    %v793 = vpop.permute.xlu0 %792
    %v794 = vsel %vm120, %v791, %v793
    %v795 = vsel %vm120, %v793, %v791
    %v796 = vld [vmem:[%s360] sm:$0xff]
    %v799 = vcombine.low %v795, %v794
    %v801 = vmul.f32 %v796, %v799
    %v803 = vcombine.high %v801, %v801
    %v805 = vadd.f32 %v788, %v801
    %v806 = vadd.f32 %v789, %v803
    %807 = vrot.lane.b32.xlu0 %v754, 1
    %v808 = vpop.permute.xlu0 %807
    %809 = vrot.lane.b32.xlu0 %v755, 1
    %v810 = vpop.permute.xlu0 %809
    %v811 = vsel %vm139, %v808, %v810
    %v812 = vsel %vm139, %v810, %v808
    %v813 = vld [vmem:[%s378] sm:$0xff]
    %v816 = vcombine.low %v812, %v811
    %v818 = vmul.f32 %v813, %v816
    %v820 = vcombine.high %v818, %v818
    %v822 = vadd.f32 %v805, %v818
    %v823 = vadd.f32 %v806, %v820
    %v824 = vld [vmem:[%s390] sm:$0xff]
    %v827 = vcombine.low %v754, %v755
    %v829 = vmul.f32 %v824, %v827
    %v831 = vcombine.high %v829, %v829
    %v833 = vadd.f32 %v822, %v829
    %v834 = vadd.f32 %v823, %v831
    %835 = vrot.lane.b32.xlu0 %v754, 127
    %v836 = vpop.permute.xlu0 %835
    %837 = vrot.lane.b32.xlu0 %v755, 127
    %v838 = vpop.permute.xlu0 %837
    %v839 = vsel %vm166, %v836, %v838
    %v840 = vsel %vm166, %v838, %v836
    %v841 = vld [vmem:[%s408] sm:$0xff]
    %v844 = vcombine.low %v839, %v840
    %v846 = vmul.f32 %v841, %v844
    %v848 = vcombine.high %v846, %v846
    %v850 = vadd.f32 %v833, %v846
    %v851 = vadd.f32 %v834, %v848
    %852 = vrot.lane.b32.xlu0 %v754, 113
    %v853 = vpop.permute.xlu0 %852
    %854 = vrot.lane.b32.xlu0 %v755, 113
    %v855 = vpop.permute.xlu0 %854
    %v856 = vsel %vm185, %v853, %v855
    %v857 = vsel %vm185, %v855, %v853
    %v858 = vld [vmem:[%s426] sm:$0xff]
    %v861 = vcombine.low %v856, %v857
    %v863 = vmul.f32 %v858, %v861
    %v865 = vcombine.high %v863, %v863
    %v867 = vadd.f32 %v850, %v863
    %v868 = vadd.f32 %v851, %v865
    %869 = vrot.lane.b32.xlu0 %v754, 112
    %v870 = vpop.permute.xlu0 %869
    %871 = vrot.lane.b32.xlu0 %v755, 112
    %v872 = vpop.permute.xlu0 %871
    %v873 = vsel %vm204, %v870, %v872
    %v874 = vsel %vm204, %v872, %v870
    %v875 = vld [vmem:[%s444] sm:$0xff]
    %v878 = vcombine.low %v873, %v874
    %v880 = vmul.f32 %v875, %v878
    %v882 = vcombine.high %v880, %v880
    %v884 = vadd.f32 %v867, %v880
    %v885 = vadd.f32 %v868, %v882
    %886 = vrot.lane.b32.xlu0 %v754, 111
    %v887 = vpop.permute.xlu0 %886
    %888 = vrot.lane.b32.xlu0 %v755, 111
    %v889 = vpop.permute.xlu0 %888
    %v890 = vsel %vm223, %v887, %v889
    %v891 = vsel %vm223, %v889, %v887
    %v892 = vld [vmem:[%s462] sm:$0xff]
    %v895 = vcombine.low %v890, %v891
    %v897 = vmul.f32 %v892, %v895
    %v899 = vcombine.high %v897, %v897
    %v901 = vadd.f32 %v884, %v897
    %v902 = vadd.f32 %v885, %v899
    %v903 = vmax.f32 %v901, 0.0
    %v904 = vmax.f32 %v902, 0.0
    %v905 = vlaneseq
    %v906 = vshrl.u32 %v905, 7
    %v907 = vsub.s32 0, %v906
    %v908 = vrot.slane %v903, %v907
    %v909 = vlaneseq
    %v910 = vshrl.u32 %v909, 7
    %v911 = vsub.s32 0, %v910
    %v912 = vrot.slane %v904, %v911
    %v913 = vmul.f32 %v485, %v908
    %v914 = vmul.f32 %v485, %v912
    %v915 = vadd.f32 %v481, %v913
    %v916 = vadd.f32 %v481, %v914
    %v917 = vlaneseq
    %v918 = vshrl.u32 %v917, 7
    %v919 = vsub.s32 1, %v918
    %v920 = vrot.slane %v903, %v919
    %v921 = vlaneseq
    %v922 = vshrl.u32 %v921, 7
    %v923 = vsub.s32 1, %v922
    %v924 = vrot.slane %v904, %v923
    %v925 = vmul.f32 %v501, %v920
    %v926 = vmul.f32 %v501, %v924
    %v927 = vadd.f32 %v915, %v925
    %v928 = vadd.f32 %v916, %v926
    %v929 = vlaneseq
    %v930 = vshrl.u32 %v929, 7
    %v931 = vsub.s32 2, %v930
    %v932 = vrot.slane %v903, %v931
    %v933 = vlaneseq
    %v934 = vshrl.u32 %v933, 7
    %v935 = vsub.s32 2, %v934
    %v936 = vrot.slane %v904, %v935
    %v937 = vmul.f32 %v517, %v932
    %v938 = vmul.f32 %v517, %v936
    %v939 = vadd.f32 %v927, %v937
    %v940 = vadd.f32 %v928, %v938
    %v941 = vlaneseq
    %v942 = vshrl.u32 %v941, 7
    %v943 = vsub.s32 3, %v942
    %v944 = vrot.slane %v903, %v943
    %v945 = vlaneseq
    %v946 = vshrl.u32 %v945, 7
    %v947 = vsub.s32 3, %v946
    %v948 = vrot.slane %v904, %v947
    %v949 = vmul.f32 %v533, %v944
    %v950 = vmul.f32 %v533, %v948
    %v951 = vadd.f32 %v939, %v949
    %v952 = vadd.f32 %v940, %v950
    %v953 = vadd.f32 %v951, %v557
    %v954 = vadd.f32 %v952, %v559
    %v955 = vmax.f32 %v953, 0.0
    %v956 = vmax.f32 %v954, 0.0
    %v959 = vcombine.low %v955, %v956
    %s961 = scalar_lea.vmem [#allocation7], 8
    %962 = vst [vmem:[%s961] sm:$0xff] %v959
    // Predicated region
    $region46: #{tpu_custom_call.1} parent=1 // pred_check
      _
    $region47: #{tpu_custom_call.1} parent=1 // pred_check_branch
      %964 = sbr.rel (0) target = $region49
    $region48: #{tpu_custom_call.1} parent=1 // pred_region
      %s966 = ssub.s32 256, 256
      %967 = vsyncadd [#allocation4], %s966
      %s968 = sshll.u32 [#allocation7], 4
      %s969 = int_to_ptr.vmem [resolvable:$true] %s968
      %974 = dma.vmem_to_hbm [thread:$0]  %s969, 256, %s9, [#allocation4], 128, 128, 8
    $region49: #{tpu_custom_call.1} parent=1 // pred_fallthru
      _
    // Predicated region
    $region50: #{tpu_custom_call.1} parent=1 // pred_check
      _
    $region51: #{tpu_custom_call.1} parent=1 // pred_check_branch
      %976 = sbr.rel (0) target = $region53
    $region52: #{tpu_custom_call.1} parent=1 // pred_region
      %977 = dma.done [#allocation4], 256
    $region53: #{tpu_custom_call.1} parent=1 // pred_fallthru
      _
    %978 = vsyncpa [#allocation3], 1
    %979 = vsyncpa [#allocation6], 1
    %980 = vsyncpa [#allocation4], 1

</llo_original>
